<compile_context>
chip_gen: v7x
topology: tpu7x:2x2x1
jax: 0.10.0
libtpu: 0.0.40
codegen_flags: <defaults>
</compile_context>

<pallas_src>
import functools

import jax
import jax.numpy as jnp
from jax.experimental import pallas as pl
from jax.experimental.pallas import tpu as pltpu

_LANE = 128


def _vmem_limit_bytes():
    # v7x: 64 MiB physical per TensorCore -> stay <= 48 MiB; v5e/v6e: 128 MiB.
    try:
        kind = jax.devices()[0].device_kind.lower()
    except Exception:
        return 32 * 1024 * 1024
    if "v7" in kind:
        return 48 * 1024 * 1024
    return 64 * 1024 * 1024


# ------------------------------- fused kernel -------------------------------

def _fused_kernel(lhs1_ref, w1_ref, w2_ref, b2_ref, wfc_ref, bfc_ref, o_ref,
                  slab_ref, acc_ref, *, ho2, wo2):
    """conv1+ReLU -> (VMEM slab) -> conv2+bias+ReLU -> global-avg-pool -> FC.

    lhs1_ref : (1, 4, R2, 9*Cin+1) bf16.  For conv2-phase q = 2*pr + pc, row k
               is the conv1 im2col patch (plus a trailing "1" valid/bias
               column) of the conv1 output pixel that lands at position k of
               that phase of conv2's zero-padded input; border / slack rows
               are all-zero, so ReLU(row @ w1_aug) is exactly the slab value.
    w1_ref   : (9*Cin+1, 64) bf16, conv1 weights with the bias as last row.
    w2_ref   : (9, 64, 128) bf16, conv2 weights, tap index t = kh*3 + kw.
    slab_ref : (4, R2, 64) bf16 VMEM scratch — conv1 output, phase-split and
               flattened so every conv2 tap is a contiguous row window.
    acc_ref  : (ho2*(wo2+1), 128) f32 VMEM scratch — conv2 accumulator.
    """
    wp = wo2 + 1
    m = ho2 * wp

    # conv1: one K=(9*Cin+1) matmul per conv2 phase, bias folded via the "1"
    # column; ReLU'd result stored once as bf16 (conv2 never re-casts it).
    for q in range(4):
        z = jnp.dot(lhs1_ref[0, q], w1_ref[...],
                    preferred_element_type=jnp.float32)
        slab_ref[q] = jnp.maximum(z, 0.0).astype(jnp.bfloat16)

    # conv2: 9 tap matmuls over the real 64 channels, accumulated in a VMEM
    # scratch (in-place accumulate; MRB-friendly on v7x).
    # TODO(synk): pack same-phase taps to K=128/256 for v6e/v7x MXU depth.
    for t in range(9):
        kh, kw = divmod(t, 3)
        q = (kh % 2) * 2 + (kw % 2)
        start = (kh // 2) * wp + (kw // 2)
        d = jnp.dot(slab_ref[q, pl.ds(start, m), :], w2_ref[t],
                    preferred_element_type=jnp.float32)
        if t == 0:
            acc_ref[...] = d
        else:
            acc_ref[...] += d

    # bias + ReLU + junk-row mask in a single select, then masked global mean.
    zb = acc_ref[...] + b2_ref[...]
    row = jax.lax.broadcasted_iota(jnp.int32, (m, 1), 0)
    keep = jnp.logical_and((row % wp) < wo2, zb > 0.0)
    z = jnp.where(keep, zb, 0.0)
    pooled = jnp.sum(z, axis=0, keepdims=True) * (1.0 / (ho2 * wo2))

    # FC: (1,128) x (128,128-padded) — lane-dense unmasked output store.
    o_ref[0] = jnp.dot(pooled.astype(jnp.bfloat16), wfc_ref[...],
                       preferred_element_type=jnp.float32) + bfc_ref[...]


# --------------------------------- forward ----------------------------------

def distortion_classifier_forward(x_nchw, params):
    """Matches DistortionClassifier.forward: conv(3x3,s2,p1)+ReLU,
    conv(3x3,s2,p1)+ReLU, AdaptiveAvgPool2d((1,1)), flatten, Linear."""
    n, cin, h, w = x_nchw.shape
    # TODO(synk): odd / non-multiple-of-4 spatial sizes need ragged phase handling.
    assert h % 4 == 0 and w % 4 == 0
    ho1, wo1 = h // 2, w // 2
    ho2, wo2 = ho1 // 2, wo1 // 2
    wp = wo2 + 1
    m = ho2 * wp
    r2 = (ho2 + 1) * wp + 1
    k1 = 9 * cin + 1
    num_out = params["wfc"].shape[1]

    # ---- cheap XLA-side layout prep (tiny tensors, no activation blow-up) ----
    x = jnp.transpose(x_nchw, (0, 2, 3, 1))                      # NCHW -> NHWC
    xp = jnp.pad(x, ((0, 0), (1, 1), (1, 1), (0, 0)))

    # conv1 im2col (tap-major, channel-minor) + constant "1" column.
    taps = [xp[:, kh:kh + 2 * ho1:2, kw:kw + 2 * wo1:2, :]
            for kh in range(3) for kw in range(3)]
    p1 = jnp.stack(taps, axis=3).reshape(n, ho1, wo1, 9 * cin)
    p1 = jnp.concatenate([p1, jnp.ones((n, ho1, wo1, 1), p1.dtype)], axis=-1)
    # conv2's zero padding of conv1's output, split into the 4 conv2 phases
    # (row/col parity of the padded map), each flattened row-major with one
    # trailing slack row so every conv2 tap is a contiguous row window.
    p1 = jnp.pad(p1, ((0, 0), (1, 1), (1, 1), (0, 0)))
    phases = [p1[:, pr::2, pc::2, :].reshape(n, (ho2 + 1) * wp, k1)
              for pr in (0, 1) for pc in (0, 1)]
    lhs1 = jnp.stack(phases, axis=1)
    lhs1 = jnp.pad(lhs1, ((0, 0), (0, 0), (0, 1), (0, 0))).astype(jnp.bfloat16)

    # conv1 weights (HWIO) -> (9*Cin, 64) with the bias as the last row (bf16).
    w1 = jnp.concatenate(
        [params["w1"].reshape(9 * cin, -1), params["b1"][None, :]],
        axis=0).astype(jnp.bfloat16)
    # conv2 weights (HWIO) -> (9, 64, 128); real 64 input channels, no zero pad.
    w2 = params["w2"].reshape(9, params["w2"].shape[2], -1).astype(jnp.bfloat16)
    b2 = params["b2"].reshape(1, -1).astype(jnp.float32)
    # FC: pad the num_distortions logits to a full 128-lane store.
    pad_out = (-params["wfc"].shape[1]) % _LANE
    wfc = jnp.pad(params["wfc"], ((0, 0), (0, pad_out))).astype(jnp.bfloat16)
    bfc = jnp.pad(params["bfc"], ((0, pad_out),)).reshape(1, -1).astype(jnp.float32)

    c1 = w1.shape[1]
    c2 = w2.shape[2]
    op = wfc.shape[1]

    cost = pl.CostEstimate(
        flops=2 * n * (4 * r2 * k1 * c1 + 9 * m * c1 * c2 + c2 * op),
        transcendentals=0,
        bytes_accessed=(lhs1.size * 2 + w1.size * 2 + w2.size * 2 + b2.size * 4
                        + wfc.size * 2 + bfc.size * 4 + n * op * 4))

    out = pl.pallas_call(
        functools.partial(_fused_kernel, ho2=ho2, wo2=wo2),
        out_shape=jax.ShapeDtypeStruct((n, 1, op), jnp.float32),
        grid=(n,),
        in_specs=[
            pl.BlockSpec((1, 4, r2, k1), lambda i: (i, 0, 0, 0),
                         memory_space=pltpu.MemorySpace.VMEM),
            pl.BlockSpec(w1.shape, lambda i: (0, 0),
                         memory_space=pltpu.MemorySpace.VMEM),
            pl.BlockSpec(w2.shape, lambda i: (0, 0, 0),
                         memory_space=pltpu.MemorySpace.VMEM),
            pl.BlockSpec(b2.shape, lambda i: (0, 0),
                         memory_space=pltpu.MemorySpace.VMEM),
            pl.BlockSpec(wfc.shape, lambda i: (0, 0),
                         memory_space=pltpu.MemorySpace.VMEM),
            pl.BlockSpec(bfc.shape, lambda i: (0, 0),
                         memory_space=pltpu.MemorySpace.VMEM),
        ],
        out_specs=pl.BlockSpec((1, 1, op), lambda i: (i, 0, 0),
                               memory_space=pltpu.MemorySpace.VMEM),
        scratch_shapes=[
            pltpu.VMEM((4, r2, c1), jnp.bfloat16),   # conv1 output slab (bf16)
            pltpu.VMEM((m, c2), jnp.float32),        # conv2 f32 accumulator
        ],
        compiler_params=pltpu.CompilerParams(
            dimension_semantics=("parallel",),
            vmem_limit_bytes=_vmem_limit_bytes()),
        cost_estimate=cost,
    )(lhs1, w1, w2, b2, wfc, bfc)

    return out.reshape(n, op)[:, :num_out]


# --------------------------- params / reference -----------------------------

def init_params(key, in_channels, num_distortions=25):
    # Conv weights are HWIO (kh, kw, Cin, Cout).  To load real PyTorch OIHW
    # Conv2d weights, permute with w.transpose(2, 3, 1, 0) first.
    k1, k2, k3, k4, k5, k6 = jax.random.split(key, 6)
    s = 0.05
    return {
        "w1": jax.random.normal(k1, (3, 3, in_channels, 64), jnp.float32) * s,
        "b1": jax.random.normal(k2, (64,), jnp.float32) * s,
        "w2": jax.random.normal(k3, (3, 3, 64, 128), jnp.float32) * s,
        "b2": jax.random.normal(k4, (128,), jnp.float32) * s,
        "wfc": jax.random.normal(k5, (128, num_distortions), jnp.float32) * s,
        "bfc": jax.random.normal(k6, (num_distortions,), jnp.float32) * s,
    }


def _reference_forward(x_nchw, params):
    """Pure-XLA float32 reference for a numerics sanity check."""
    x = jnp.transpose(x_nchw, (0, 2, 3, 1))
    dn = ("NHWC", "HWIO", "NHWC")
    y = jax.lax.conv_general_dilated(x, params["w1"], (2, 2), ((1, 1), (1, 1)),
                                     dimension_numbers=dn)
    y = jax.nn.relu(y + params["b1"])
    y = jax.lax.conv_general_dilated(y, params["w2"], (2, 2), ((1, 1), (1, 1)),
                                     dimension_numbers=dn)
    y = jax.nn.relu(y + params["b2"])
    pooled = jnp.mean(y, axis=(1, 2))
    return pooled @ params["wfc"] + params["bfc"]


if __name__ == "__main__":
    key = jax.random.PRNGKey(0)
    kx, kp = jax.random.split(key)

    batch, in_channels, spatial, num_distortions = 2, 4, 16, 25
    x = jax.random.normal(kx, (batch, in_channels, spatial, spatial), jnp.float32)
    params = init_params(kp, in_channels, num_distortions)

    out = jax.block_until_ready(jax.jit(distortion_classifier_forward)(x, params))
    assert out.shape == (batch, num_distortions), out.shape
    assert out.dtype == jnp.float32

    # Sanity check vs. a pure-XLA f32 reference (loose tolerance: bf16 matmul
    # operands with f32 accumulation).
    ref = jax.block_until_ready(_reference_forward(x, params))
    assert bool(jnp.allclose(out, ref, rtol=5e-2, atol=3e-2)), (
        float(jnp.max(jnp.abs(out - ref))))
    print("KERNEL_OK")
</pallas_src>

<mosaic_0001>
module attributes {stable_mosaic.version = 11 : i64} {
  func.func @_fused_kernel(%arg0: i32, %arg1: memref<1x4x26x37xbf16, #tpu.memory_space<vmem>>, %arg2: memref<37x64xbf16, #tpu.memory_space<vmem>>, %arg3: memref<9x64x128xbf16, #tpu.memory_space<vmem>>, %arg4: memref<1x128xf32, #tpu.memory_space<vmem>>, %arg5: memref<128x128xbf16, #tpu.memory_space<vmem>>, %arg6: memref<1x128xf32, #tpu.memory_space<vmem>>, %arg7: memref<1x1x128xf32, #tpu.memory_space<vmem>>, %arg8: memref<4x26x64xbf16, #tpu.memory_space<vmem>>, %arg9: memref<20x128xf32, #tpu.memory_space<vmem>>) attributes {dimension_semantics = [#tpu.dimension_semantics<parallel>], iteration_bounds = array<i64: 2>, scalar_prefetch = 0 : i64, scratch_operands = 2 : i64, tpu.core_type = #tpu.core_type<tc>, window_params = [{transform_indices = @transform_0, window_bounds = array<i64: 1, 4, 26, 37>}, {pipeline_mode = #tpu.pipeline_mode<synchronous>, transform_indices = @transform_1, window_bounds = array<i64: 37, 64>}, {pipeline_mode = #tpu.pipeline_mode<synchronous>, transform_indices = @transform_2, window_bounds = array<i64: 9, 64, 128>}, {pipeline_mode = #tpu.pipeline_mode<synchronous>, transform_indices = @transform_3, window_bounds = array<i64: 1, 128>}, {pipeline_mode = #tpu.pipeline_mode<synchronous>, transform_indices = @transform_4, window_bounds = array<i64: 128, 128>}, {pipeline_mode = #tpu.pipeline_mode<synchronous>, transform_indices = @transform_5, window_bounds = array<i64: 1, 128>}, {transform_indices = @transform_6, window_bounds = array<i64: 1, 1, 128>}]} {
    %c0 = arith.constant 0 : index
    %c0_0 = arith.constant 0 : index
    %c0_1 = arith.constant 0 : index
    %c0_2 = arith.constant 0 : index
    %0 = vector.load %arg1[%c0, %c0_0, %c0_1, %c0_2] : memref<1x4x26x37xbf16, #tpu.memory_space<vmem>>, vector<1x1x26x37xbf16>
    %1 = vector.shape_cast %0 : vector<1x1x26x37xbf16> to vector<26x37xbf16>
    %c0_3 = arith.constant 0 : index
    %c0_4 = arith.constant 0 : index
    %2 = vector.load %arg2[%c0_3, %c0_4] : memref<37x64xbf16, #tpu.memory_space<vmem>>, vector<37x64xbf16>
    %cst = arith.constant dense<0.000000e+00> : vector<26x64xf32>
    %3 = tpu.matmul %1, %2, %cst {dimension_numbers = #tpu.dot_dimension_numbers<[1], [0], [0], [1], [0, 0, 1, 1], [], []>} : vector<26x37xbf16>, vector<37x64xbf16>, vector<26x64xf32> -> vector<26x64xf32>
    %cst_5 = arith.constant 0.000000e+00 : f32
    %4 = vector.broadcast %cst_5 : f32 to vector<26x64xf32>
    %5 = arith.maximumf %3, %4 : vector<26x64xf32>
    %6 = arith.truncf %5 : vector<26x64xf32> to vector<26x64xbf16>
    %c0_6 = arith.constant 0 : index
    %c0_7 = arith.constant 0 : index
    %c0_8 = arith.constant 0 : index
    %7 = vector.load %arg8[%c0_6, %c0_7, %c0_8] : memref<4x26x64xbf16, #tpu.memory_space<vmem>>, vector<1x26x64xbf16>
    %8 = vector.shape_cast %7 : vector<1x26x64xbf16> to vector<26x64xbf16>
    %9 = vector.shape_cast %6 : vector<26x64xbf16> to vector<1x26x64xbf16>
    tpu.vector_store %arg8[%c0_6, %c0_7, %c0_8], %9 {strides = array<i32>} : memref<4x26x64xbf16, #tpu.memory_space<vmem>>, vector<1x26x64xbf16>,
    %c0_9 = arith.constant 0 : index
    %c1 = arith.constant 1 : index
    %c0_10 = arith.constant 0 : index
    %c0_11 = arith.constant 0 : index
    %10 = vector.load %arg1[%c0_9, %c1, %c0_10, %c0_11] : memref<1x4x26x37xbf16, #tpu.memory_space<vmem>>, vector<1x1x26x37xbf16>
    %11 = vector.shape_cast %10 : vector<1x1x26x37xbf16> to vector<26x37xbf16>
    %c0_12 = arith.constant 0 : index
    %c0_13 = arith.constant 0 : index
    %12 = vector.load %arg2[%c0_12, %c0_13] : memref<37x64xbf16, #tpu.memory_space<vmem>>, vector<37x64xbf16>
    %cst_14 = arith.constant dense<0.000000e+00> : vector<26x64xf32>
    %13 = tpu.matmul %11, %12, %cst_14 {dimension_numbers = #tpu.dot_dimension_numbers<[1], [0], [0], [1], [0, 0, 1, 1], [], []>} : vector<26x37xbf16>, vector<37x64xbf16>, vector<26x64xf32> -> vector<26x64xf32>
    %cst_15 = arith.constant 0.000000e+00 : f32
    %14 = vector.broadcast %cst_15 : f32 to vector<26x64xf32>
    %15 = arith.maximumf %13, %14 : vector<26x64xf32>
    %16 = arith.truncf %15 : vector<26x64xf32> to vector<26x64xbf16>
    %c1_16 = arith.constant 1 : index
    %c0_17 = arith.constant 0 : index
    %c0_18 = arith.constant 0 : index
    %17 = vector.load %arg8[%c1_16, %c0_17, %c0_18] : memref<4x26x64xbf16, #tpu.memory_space<vmem>>, vector<1x26x64xbf16>
    %18 = vector.shape_cast %17 : vector<1x26x64xbf16> to vector<26x64xbf16>
    %19 = vector.shape_cast %16 : vector<26x64xbf16> to vector<1x26x64xbf16>
    tpu.vector_store %arg8[%c1_16, %c0_17, %c0_18], %19 {strides = array<i32>} : memref<4x26x64xbf16, #tpu.memory_space<vmem>>, vector<1x26x64xbf16>,
    %c0_19 = arith.constant 0 : index
    %c2 = arith.constant 2 : index
    %c0_20 = arith.constant 0 : index
    %c0_21 = arith.constant 0 : index
    %20 = vector.load %arg1[%c0_19, %c2, %c0_20, %c0_21] : memref<1x4x26x37xbf16, #tpu.memory_space<vmem>>, vector<1x1x26x37xbf16>
    %21 = vector.shape_cast %20 : vector<1x1x26x37xbf16> to vector<26x37xbf16>
    %c0_22 = arith.constant 0 : index
    %c0_23 = arith.constant 0 : index
    %22 = vector.load %arg2[%c0_22, %c0_23] : memref<37x64xbf16, #tpu.memory_space<vmem>>, vector<37x64xbf16>
    %cst_24 = arith.constant dense<0.000000e+00> : vector<26x64xf32>
    %23 = tpu.matmul %21, %22, %cst_24 {dimension_numbers = #tpu.dot_dimension_numbers<[1], [0], [0], [1], [0, 0, 1, 1], [], []>} : vector<26x37xbf16>, vector<37x64xbf16>, vector<26x64xf32> -> vector<26x64xf32>
    %cst_25 = arith.constant 0.000000e+00 : f32
    %24 = vector.broadcast %cst_25 : f32 to vector<26x64xf32>
    %25 = arith.maximumf %23, %24 : vector<26x64xf32>
    %26 = arith.truncf %25 : vector<26x64xf32> to vector<26x64xbf16>
    %c2_26 = arith.constant 2 : index
    %c0_27 = arith.constant 0 : index
    %c0_28 = arith.constant 0 : index
    %27 = vector.load %arg8[%c2_26, %c0_27, %c0_28] : memref<4x26x64xbf16, #tpu.memory_space<vmem>>, vector<1x26x64xbf16>
    %28 = vector.shape_cast %27 : vector<1x26x64xbf16> to vector<26x64xbf16>
    %29 = vector.shape_cast %26 : vector<26x64xbf16> to vector<1x26x64xbf16>
    tpu.vector_store %arg8[%c2_26, %c0_27, %c0_28], %29 {strides = array<i32>} : memref<4x26x64xbf16, #tpu.memory_space<vmem>>, vector<1x26x64xbf16>,
    %c0_29 = arith.constant 0 : index
    %c3 = arith.constant 3 : index
    %c0_30 = arith.constant 0 : index
    %c0_31 = arith.constant 0 : index
    %30 = vector.load %arg1[%c0_29, %c3, %c0_30, %c0_31] : memref<1x4x26x37xbf16, #tpu.memory_space<vmem>>, vector<1x1x26x37xbf16>
    %31 = vector.shape_cast %30 : vector<1x1x26x37xbf16> to vector<26x37xbf16>
    %c0_32 = arith.constant 0 : index
    %c0_33 = arith.constant 0 : index
    %32 = vector.load %arg2[%c0_32, %c0_33] : memref<37x64xbf16, #tpu.memory_space<vmem>>, vector<37x64xbf16>
    %cst_34 = arith.constant dense<0.000000e+00> : vector<26x64xf32>
    %33 = tpu.matmul %31, %32, %cst_34 {dimension_numbers = #tpu.dot_dimension_numbers<[1], [0], [0], [1], [0, 0, 1, 1], [], []>} : vector<26x37xbf16>, vector<37x64xbf16>, vector<26x64xf32> -> vector<26x64xf32>
    %cst_35 = arith.constant 0.000000e+00 : f32
    %34 = vector.broadcast %cst_35 : f32 to vector<26x64xf32>
    %35 = arith.maximumf %33, %34 : vector<26x64xf32>
    %36 = arith.truncf %35 : vector<26x64xf32> to vector<26x64xbf16>
    %c3_36 = arith.constant 3 : index
    %c0_37 = arith.constant 0 : index
    %c0_38 = arith.constant 0 : index
    %37 = vector.load %arg8[%c3_36, %c0_37, %c0_38] : memref<4x26x64xbf16, #tpu.memory_space<vmem>>, vector<1x26x64xbf16>
    %38 = vector.shape_cast %37 : vector<1x26x64xbf16> to vector<26x64xbf16>
    %39 = vector.shape_cast %36 : vector<26x64xbf16> to vector<1x26x64xbf16>
    tpu.vector_store %arg8[%c3_36, %c0_37, %c0_38], %39 {strides = array<i32>} : memref<4x26x64xbf16, #tpu.memory_space<vmem>>, vector<1x26x64xbf16>,
    %c0_39 = arith.constant 0 : index
    %c0_40 = arith.constant 0 : index
    %c0_41 = arith.constant 0 : index
    %40 = vector.load %arg8[%c0_39, %c0_40, %c0_41] : memref<4x26x64xbf16, #tpu.memory_space<vmem>>, vector<1x20x64xbf16>
    %41 = vector.shape_cast %40 : vector<1x20x64xbf16> to vector<20x64xbf16>
    %c0_42 = arith.constant 0 : index
    %c0_43 = arith.constant 0 : index
    %c0_44 = arith.constant 0 : index
    %42 = vector.load %arg3[%c0_42, %c0_43, %c0_44] : memref<9x64x128xbf16, #tpu.memory_space<vmem>>, vector<1x64x128xbf16>
    %43 = vector.shape_cast %42 : vector<1x64x128xbf16> to vector<64x128xbf16>
    %cst_45 = arith.constant dense<0.000000e+00> : vector<20x128xf32>
    %44 = tpu.matmul %41, %43, %cst_45 {dimension_numbers = #tpu.dot_dimension_numbers<[1], [0], [0], [1], [0, 0, 1, 1], [], []>} : vector<20x64xbf16>, vector<64x128xbf16>, vector<20x128xf32> -> vector<20x128xf32>
    %c0_46 = arith.constant 0 : index
    %c0_47 = arith.constant 0 : index
    %45 = vector.load %arg9[%c0_46, %c0_47] : memref<20x128xf32, #tpu.memory_space<vmem>>, vector<20x128xf32>
    tpu.vector_store %arg9[%c0_46, %c0_47], %44 {strides = array<i32>} : memref<20x128xf32, #tpu.memory_space<vmem>>, vector<20x128xf32>,
    %c1_48 = arith.constant 1 : index
    %c0_49 = arith.constant 0 : index
    %c0_50 = arith.constant 0 : index
    %46 = vector.load %arg8[%c1_48, %c0_49, %c0_50] : memref<4x26x64xbf16, #tpu.memory_space<vmem>>, vector<1x20x64xbf16>
    %47 = vector.shape_cast %46 : vector<1x20x64xbf16> to vector<20x64xbf16>
    %c1_51 = arith.constant 1 : index
    %c0_52 = arith.constant 0 : index
    %c0_53 = arith.constant 0 : index
    %48 = vector.load %arg3[%c1_51, %c0_52, %c0_53] : memref<9x64x128xbf16, #tpu.memory_space<vmem>>, vector<1x64x128xbf16>
    %49 = vector.shape_cast %48 : vector<1x64x128xbf16> to vector<64x128xbf16>
    %cst_54 = arith.constant dense<0.000000e+00> : vector<20x128xf32>
    %50 = tpu.matmul %47, %49, %cst_54 {dimension_numbers = #tpu.dot_dimension_numbers<[1], [0], [0], [1], [0, 0, 1, 1], [], []>} : vector<20x64xbf16>, vector<64x128xbf16>, vector<20x128xf32> -> vector<20x128xf32>
    %c0_55 = arith.constant 0 : index
    %c0_56 = arith.constant 0 : index
    %51 = vector.load %arg9[%c0_55, %c0_56] : memref<20x128xf32, #tpu.memory_space<vmem>>, vector<20x128xf32>
    %52 = arith.addf %51, %50 : vector<20x128xf32>
    %c0_57 = arith.constant 0 : index
    %c0_58 = arith.constant 0 : index
    %53 = vector.load %arg9[%c0_57, %c0_58] : memref<20x128xf32, #tpu.memory_space<vmem>>, vector<20x128xf32>
    tpu.vector_store %arg9[%c0_57, %c0_58], %52 {strides = array<i32>} : memref<20x128xf32, #tpu.memory_space<vmem>>, vector<20x128xf32>,
    %c0_59 = arith.constant 0 : index
    %c1_60 = arith.constant 1 : index
    %c0_61 = arith.constant 0 : index
    %54 = vector.load %arg8[%c0_59, %c1_60, %c0_61] : memref<4x26x64xbf16, #tpu.memory_space<vmem>>, vector<1x20x64xbf16>
    %55 = vector.shape_cast %54 : vector<1x20x64xbf16> to vector<20x64xbf16>
    %c2_62 = arith.constant 2 : index
    %c0_63 = arith.constant 0 : index
    %c0_64 = arith.constant 0 : index
    %56 = vector.load %arg3[%c2_62, %c0_63, %c0_64] : memref<9x64x128xbf16, #tpu.memory_space<vmem>>, vector<1x64x128xbf16>
    %57 = vector.shape_cast %56 : vector<1x64x128xbf16> to vector<64x128xbf16>
    %cst_65 = arith.constant dense<0.000000e+00> : vector<20x128xf32>
    %58 = tpu.matmul %55, %57, %cst_65 {dimension_numbers = #tpu.dot_dimension_numbers<[1], [0], [0], [1], [0, 0, 1, 1], [], []>} : vector<20x64xbf16>, vector<64x128xbf16>, vector<20x128xf32> -> vector<20x128xf32>
    %c0_66 = arith.constant 0 : index
    %c0_67 = arith.constant 0 : index
    %59 = vector.load %arg9[%c0_66, %c0_67] : memref<20x128xf32, #tpu.memory_space<vmem>>, vector<20x128xf32>
    %60 = arith.addf %59, %58 : vector<20x128xf32>
    %c0_68 = arith.constant 0 : index
    %c0_69 = arith.constant 0 : index
    %61 = vector.load %arg9[%c0_68, %c0_69] : memref<20x128xf32, #tpu.memory_space<vmem>>, vector<20x128xf32>
    tpu.vector_store %arg9[%c0_68, %c0_69], %60 {strides = array<i32>} : memref<20x128xf32, #tpu.memory_space<vmem>>, vector<20x128xf32>,
    %c2_70 = arith.constant 2 : index
    %c0_71 = arith.constant 0 : index
    %c0_72 = arith.constant 0 : index
    %62 = vector.load %arg8[%c2_70, %c0_71, %c0_72] : memref<4x26x64xbf16, #tpu.memory_space<vmem>>, vector<1x20x64xbf16>
    %63 = vector.shape_cast %62 : vector<1x20x64xbf16> to vector<20x64xbf16>
    %c3_73 = arith.constant 3 : index
    %c0_74 = arith.constant 0 : index
    %c0_75 = arith.constant 0 : index
    %64 = vector.load %arg3[%c3_73, %c0_74, %c0_75] : memref<9x64x128xbf16, #tpu.memory_space<vmem>>, vector<1x64x128xbf16>
    %65 = vector.shape_cast %64 : vector<1x64x128xbf16> to vector<64x128xbf16>
    %cst_76 = arith.constant dense<0.000000e+00> : vector<20x128xf32>
    %66 = tpu.matmul %63, %65, %cst_76 {dimension_numbers = #tpu.dot_dimension_numbers<[1], [0], [0], [1], [0, 0, 1, 1], [], []>} : vector<20x64xbf16>, vector<64x128xbf16>, vector<20x128xf32> -> vector<20x128xf32>
    %c0_77 = arith.constant 0 : index
    %c0_78 = arith.constant 0 : index
    %67 = vector.load %arg9[%c0_77, %c0_78] : memref<20x128xf32, #tpu.memory_space<vmem>>, vector<20x128xf32>
    %68 = arith.addf %67, %66 : vector<20x128xf32>
    %c0_79 = arith.constant 0 : index
    %c0_80 = arith.constant 0 : index
    %69 = vector.load %arg9[%c0_79, %c0_80] : memref<20x128xf32, #tpu.memory_space<vmem>>, vector<20x128xf32>
    tpu.vector_store %arg9[%c0_79, %c0_80], %68 {strides = array<i32>} : memref<20x128xf32, #tpu.memory_space<vmem>>, vector<20x128xf32>,
    %c3_81 = arith.constant 3 : index
    %c0_82 = arith.constant 0 : index
    %c0_83 = arith.constant 0 : index
    %70 = vector.load %arg8[%c3_81, %c0_82, %c0_83] : memref<4x26x64xbf16, #tpu.memory_space<vmem>>, vector<1x20x64xbf16>
    %71 = vector.shape_cast %70 : vector<1x20x64xbf16> to vector<20x64xbf16>
    %c4 = arith.constant 4 : index
    %c0_84 = arith.constant 0 : index
    %c0_85 = arith.constant 0 : index
    %72 = vector.load %arg3[%c4, %c0_84, %c0_85] : memref<9x64x128xbf16, #tpu.memory_space<vmem>>, vector<1x64x128xbf16>
    %73 = vector.shape_cast %72 : vector<1x64x128xbf16> to vector<64x128xbf16>
    %cst_86 = arith.constant dense<0.000000e+00> : vector<20x128xf32>
    %74 = tpu.matmul %71, %73, %cst_86 {dimension_numbers = #tpu.dot_dimension_numbers<[1], [0], [0], [1], [0, 0, 1, 1], [], []>} : vector<20x64xbf16>, vector<64x128xbf16>, vector<20x128xf32> -> vector<20x128xf32>
    %c0_87 = arith.constant 0 : index
    %c0_88 = arith.constant 0 : index
    %75 = vector.load %arg9[%c0_87, %c0_88] : memref<20x128xf32, #tpu.memory_space<vmem>>, vector<20x128xf32>
    %76 = arith.addf %75, %74 : vector<20x128xf32>
    %c0_89 = arith.constant 0 : index
    %c0_90 = arith.constant 0 : index
    %77 = vector.load %arg9[%c0_89, %c0_90] : memref<20x128xf32, #tpu.memory_space<vmem>>, vector<20x128xf32>
    tpu.vector_store %arg9[%c0_89, %c0_90], %76 {strides = array<i32>} : memref<20x128xf32, #tpu.memory_space<vmem>>, vector<20x128xf32>,
    %c2_91 = arith.constant 2 : index
    %c1_92 = arith.constant 1 : index
    %c0_93 = arith.constant 0 : index
    %78 = vector.load %arg8[%c2_91, %c1_92, %c0_93] : memref<4x26x64xbf16, #tpu.memory_space<vmem>>, vector<1x20x64xbf16>
    %79 = vector.shape_cast %78 : vector<1x20x64xbf16> to vector<20x64xbf16>
    %c5 = arith.constant 5 : index
    %c0_94 = arith.constant 0 : index
    %c0_95 = arith.constant 0 : index
    %80 = vector.load %arg3[%c5, %c0_94, %c0_95] : memref<9x64x128xbf16, #tpu.memory_space<vmem>>, vector<1x64x128xbf16>
    %81 = vector.shape_cast %80 : vector<1x64x128xbf16> to vector<64x128xbf16>
    %cst_96 = arith.constant dense<0.000000e+00> : vector<20x128xf32>
    %82 = tpu.matmul %79, %81, %cst_96 {dimension_numbers = #tpu.dot_dimension_numbers<[1], [0], [0], [1], [0, 0, 1, 1], [], []>} : vector<20x64xbf16>, vector<64x128xbf16>, vector<20x128xf32> -> vector<20x128xf32>
    %c0_97 = arith.constant 0 : index
    %c0_98 = arith.constant 0 : index
    %83 = vector.load %arg9[%c0_97, %c0_98] : memref<20x128xf32, #tpu.memory_space<vmem>>, vector<20x128xf32>
    %84 = arith.addf %83, %82 : vector<20x128xf32>
    %c0_99 = arith.constant 0 : index
    %c0_100 = arith.constant 0 : index
    %85 = vector.load %arg9[%c0_99, %c0_100] : memref<20x128xf32, #tpu.memory_space<vmem>>, vector<20x128xf32>
    tpu.vector_store %arg9[%c0_99, %c0_100], %84 {strides = array<i32>} : memref<20x128xf32, #tpu.memory_space<vmem>>, vector<20x128xf32>,
    %c0_101 = arith.constant 0 : index
    %c5_102 = arith.constant 5 : index
    %c0_103 = arith.constant 0 : index
    %86 = vector.load %arg8[%c0_101, %c5_102, %c0_103] : memref<4x26x64xbf16, #tpu.memory_space<vmem>>, vector<1x20x64xbf16>
    %87 = vector.shape_cast %86 : vector<1x20x64xbf16> to vector<20x64xbf16>
    %c6 = arith.constant 6 : index
    %c0_104 = arith.constant 0 : index
    %c0_105 = arith.constant 0 : index
    %88 = vector.load %arg3[%c6, %c0_104, %c0_105] : memref<9x64x128xbf16, #tpu.memory_space<vmem>>, vector<1x64x128xbf16>
    %89 = vector.shape_cast %88 : vector<1x64x128xbf16> to vector<64x128xbf16>
    %cst_106 = arith.constant dense<0.000000e+00> : vector<20x128xf32>
    %90 = tpu.matmul %87, %89, %cst_106 {dimension_numbers = #tpu.dot_dimension_numbers<[1], [0], [0], [1], [0, 0, 1, 1], [], []>} : vector<20x64xbf16>, vector<64x128xbf16>, vector<20x128xf32> -> vector<20x128xf32>
    %c0_107 = arith.constant 0 : index
    %c0_108 = arith.constant 0 : index
    %91 = vector.load %arg9[%c0_107, %c0_108] : memref<20x128xf32, #tpu.memory_space<vmem>>, vector<20x128xf32>
    %92 = arith.addf %91, %90 : vector<20x128xf32>
    %c0_109 = arith.constant 0 : index
    %c0_110 = arith.constant 0 : index
    %93 = vector.load %arg9[%c0_109, %c0_110] : memref<20x128xf32, #tpu.memory_space<vmem>>, vector<20x128xf32>
    tpu.vector_store %arg9[%c0_109, %c0_110], %92 {strides = array<i32>} : memref<20x128xf32, #tpu.memory_space<vmem>>, vector<20x128xf32>,
    %c1_111 = arith.constant 1 : index
    %c5_112 = arith.constant 5 : index
    %c0_113 = arith.constant 0 : index
    %94 = vector.load %arg8[%c1_111, %c5_112, %c0_113] : memref<4x26x64xbf16, #tpu.memory_space<vmem>>, vector<1x20x64xbf16>
    %95 = vector.shape_cast %94 : vector<1x20x64xbf16> to vector<20x64xbf16>
    %c7 = arith.constant 7 : index
    %c0_114 = arith.constant 0 : index
    %c0_115 = arith.constant 0 : index
    %96 = vector.load %arg3[%c7, %c0_114, %c0_115] : memref<9x64x128xbf16, #tpu.memory_space<vmem>>, vector<1x64x128xbf16>
    %97 = vector.shape_cast %96 : vector<1x64x128xbf16> to vector<64x128xbf16>
    %cst_116 = arith.constant dense<0.000000e+00> : vector<20x128xf32>
    %98 = tpu.matmul %95, %97, %cst_116 {dimension_numbers = #tpu.dot_dimension_numbers<[1], [0], [0], [1], [0, 0, 1, 1], [], []>} : vector<20x64xbf16>, vector<64x128xbf16>, vector<20x128xf32> -> vector<20x128xf32>
    %c0_117 = arith.constant 0 : index
    %c0_118 = arith.constant 0 : index
    %99 = vector.load %arg9[%c0_117, %c0_118] : memref<20x128xf32, #tpu.memory_space<vmem>>, vector<20x128xf32>
    %100 = arith.addf %99, %98 : vector<20x128xf32>
    %c0_119 = arith.constant 0 : index
    %c0_120 = arith.constant 0 : index
    %101 = vector.load %arg9[%c0_119, %c0_120] : memref<20x128xf32, #tpu.memory_space<vmem>>, vector<20x128xf32>
    tpu.vector_store %arg9[%c0_119, %c0_120], %100 {strides = array<i32>} : memref<20x128xf32, #tpu.memory_space<vmem>>, vector<20x128xf32>,
    %c0_121 = arith.constant 0 : index
    %c6_122 = arith.constant 6 : index
    %c0_123 = arith.constant 0 : index
    %102 = vector.load %arg8[%c0_121, %c6_122, %c0_123] : memref<4x26x64xbf16, #tpu.memory_space<vmem>>, vector<1x20x64xbf16>
    %103 = vector.shape_cast %102 : vector<1x20x64xbf16> to vector<20x64xbf16>
    %c8 = arith.constant 8 : index
    %c0_124 = arith.constant 0 : index
    %c0_125 = arith.constant 0 : index
    %104 = vector.load %arg3[%c8, %c0_124, %c0_125] : memref<9x64x128xbf16, #tpu.memory_space<vmem>>, vector<1x64x128xbf16>
    %105 = vector.shape_cast %104 : vector<1x64x128xbf16> to vector<64x128xbf16>
    %cst_126 = arith.constant dense<0.000000e+00> : vector<20x128xf32>
    %106 = tpu.matmul %103, %105, %cst_126 {dimension_numbers = #tpu.dot_dimension_numbers<[1], [0], [0], [1], [0, 0, 1, 1], [], []>} : vector<20x64xbf16>, vector<64x128xbf16>, vector<20x128xf32> -> vector<20x128xf32>
    %c0_127 = arith.constant 0 : index
    %c0_128 = arith.constant 0 : index
    %107 = vector.load %arg9[%c0_127, %c0_128] : memref<20x128xf32, #tpu.memory_space<vmem>>, vector<20x128xf32>
    %108 = arith.addf %107, %106 : vector<20x128xf32>
    %c0_129 = arith.constant 0 : index
    %c0_130 = arith.constant 0 : index
    %109 = vector.load %arg9[%c0_129, %c0_130] : memref<20x128xf32, #tpu.memory_space<vmem>>, vector<20x128xf32>
    tpu.vector_store %arg9[%c0_129, %c0_130], %108 {strides = array<i32>} : memref<20x128xf32, #tpu.memory_space<vmem>>, vector<20x128xf32>,
    %c0_131 = arith.constant 0 : index
    %c0_132 = arith.constant 0 : index
    %110 = vector.load %arg9[%c0_131, %c0_132] : memref<20x128xf32, #tpu.memory_space<vmem>>, vector<20x128xf32>
    %c0_133 = arith.constant 0 : index
    %c0_134 = arith.constant 0 : index
    %111 = vector.load %arg4[%c0_133, %c0_134] : memref<1x128xf32, #tpu.memory_space<vmem>>, vector<1x128xf32>
    %112 = vector.broadcast %111 : vector<1x128xf32> to vector<20x128xf32>
    %113 = arith.addf %110, %112 : vector<20x128xf32>
    %114 = tpu.iota {dimensions = array<i32: 0>} : vector<20x1xi32>
    %c5_i32 = arith.constant 5 : i32
    %c0_i32 = arith.constant 0 : i32
    %115 = arith.cmpi eq, %c5_i32, %c0_i32 : i32
    %c1_i32 = arith.constant 1 : i32
    %116 = arith.select %115, %c1_i32, %c5_i32 : i32
    %117 = vector.broadcast %116 : i32 to vector<20x1xi32>
    %118 = arith.remsi %114, %117 : vector<20x1xi32>
    %c0_i32_135 = arith.constant 0 : i32
    %119 = vector.broadcast %c0_i32_135 : i32 to vector<20x1xi32>
    %120 = arith.cmpi ne, %118, %119 : vector<20x1xi32>
    %c0_i32_136 = arith.constant 0 : i32
    %121 = vector.broadcast %c0_i32_136 : i32 to vector<20x1xi32>
    %122 = arith.cmpi slt, %118, %121 : vector<20x1xi32>
    %c0_i32_137 = arith.constant 0 : i32
    %123 = arith.cmpi slt, %116, %c0_i32_137 : i32
    %124 = vector.broadcast %123 : i1 to vector<20x1xi1>
    %125 = vector.broadcast %124 : vector<20x1xi1> to vector<20x1xi1>
    %126 = arith.xori %122, %125 : vector<20x1xi1>
    %127 = arith.andi %126, %120 : vector<20x1xi1>
    %128 = vector.broadcast %116 : i32 to vector<20x1xi32>
    %129 = arith.addi %118, %128 : vector<20x1xi32>
    %130 = arith.select %127, %129, %118 : vector<20x1xi1>, vector<20x1xi32>
    %c4_i32 = arith.constant 4 : i32
    %131 = vector.broadcast %c4_i32 : i32 to vector<20x1xi32>
    %132 = arith.cmpi slt, %130, %131 : vector<20x1xi32>
    %cst_138 = arith.constant 0.000000e+00 : f32
    %133 = vector.broadcast %cst_138 : f32 to vector<20x128xf32>
    %134 = arith.cmpf ogt, %113, %133 : vector<20x128xf32>
    %135 = vector.broadcast %132 : vector<20x1xi1> to vector<20x128xi1>
    %136 = arith.andi %135, %134 : vector<20x128xi1>
    %cst_139 = arith.constant 0.000000e+00 : f32
    %137 = vector.broadcast %cst_139 : f32 to vector<20x128xf32>
    %138 = arith.select %136, %113, %137 : vector<20x128xi1>, vector<20x128xf32>
    %cst_140 = arith.constant dense<0.000000e+00> : vector<128xf32>
    %139 = vector.multi_reduction <add>, %138, %cst_140 [0] : vector<20x128xf32> to vector<128xf32>
    %140 = vector.shape_cast %139 : vector<128xf32> to vector<1x128xf32>
    %cst_141 = arith.constant 6.250000e-02 : f32
    %141 = vector.broadcast %cst_141 : f32 to vector<1x128xf32>
    %142 = arith.mulf %140, %141 : vector<1x128xf32>
    %143 = arith.truncf %142 : vector<1x128xf32> to vector<1x128xbf16>
    %c0_142 = arith.constant 0 : index
    %c0_143 = arith.constant 0 : index
    %144 = vector.load %arg5[%c0_142, %c0_143] : memref<128x128xbf16, #tpu.memory_space<vmem>>, vector<128x128xbf16>
    %cst_144 = arith.constant dense<0.000000e+00> : vector<1x128xf32>
    %145 = tpu.matmul %143, %144, %cst_144 {dimension_numbers = #tpu.dot_dimension_numbers<[1], [0], [0], [1], [0, 0, 1, 1], [], []>} : vector<1x128xbf16>, vector<128x128xbf16>, vector<1x128xf32> -> vector<1x128xf32>
    %c0_145 = arith.constant 0 : index
    %c0_146 = arith.constant 0 : index
    %146 = vector.load %arg6[%c0_145, %c0_146] : memref<1x128xf32, #tpu.memory_space<vmem>>, vector<1x128xf32>
    %147 = arith.addf %145, %146 : vector<1x128xf32>
    %c0_147 = arith.constant 0 : index
    %c0_148 = arith.constant 0 : index
    %c0_149 = arith.constant 0 : index
    %148 = vector.load %arg7[%c0_147, %c0_148, %c0_149] : memref<1x1x128xf32, #tpu.memory_space<vmem>>, vector<1x1x128xf32>
    %149 = vector.shape_cast %148 : vector<1x1x128xf32> to vector<1x128xf32>
    %150 = vector.shape_cast %147 : vector<1x128xf32> to vector<1x1x128xf32>
    tpu.vector_store %arg7[%c0_147, %c0_148, %c0_149], %150 {strides = array<i32>} : memref<1x1x128xf32, #tpu.memory_space<vmem>>, vector<1x1x128xf32>,
    return
  }
  func.func @transform_0(%arg0: i32) -> (i32, i32, i32, i32) {
    %c0_i32 = arith.constant 0 : i32
    %c0_i32_0 = arith.constant 0 : i32
    %c0_i32_1 = arith.constant 0 : i32
    %c0_i32_2 = arith.constant 0 : i32
    return %arg0, %c0_i32, %c0_i32_0, %c0_i32_1 : i32, i32, i32, i32
  }
  func.func @transform_1(%arg0: i32) -> (i32, i32) {
    %c0_i32 = arith.constant 0 : i32
    %c0_i32_0 = arith.constant 0 : i32
    %c0_i32_1 = arith.constant 0 : i32
    return %c0_i32, %c0_i32_0 : i32, i32
  }
  func.func @transform_2(%arg0: i32) -> (i32, i32, i32) {
    %c0_i32 = arith.constant 0 : i32
    %c0_i32_0 = arith.constant 0 : i32
    %c0_i32_1 = arith.constant 0 : i32
    %c0_i32_2 = arith.constant 0 : i32
    return %c0_i32, %c0_i32_0, %c0_i32_1 : i32, i32, i32
  }
  func.func @transform_3(%arg0: i32) -> (i32, i32) {
    %c0_i32 = arith.constant 0 : i32
    %c0_i32_0 = arith.constant 0 : i32
    %c0_i32_1 = arith.constant 0 : i32
    return %c0_i32, %c0_i32_0 : i32, i32
  }
  func.func @transform_4(%arg0: i32) -> (i32, i32) {
    %c0_i32 = arith.constant 0 : i32
    %c0_i32_0 = arith.constant 0 : i32
    %c0_i32_1 = arith.constant 0 : i32
    return %c0_i32, %c0_i32_0 : i32, i32
  }
  func.func @transform_5(%arg0: i32) -> (i32, i32) {
    %c0_i32 = arith.constant 0 : i32
    %c0_i32_0 = arith.constant 0 : i32
    %c0_i32_1 = arith.constant 0 : i32
    return %c0_i32, %c0_i32_0 : i32, i32
  }
  func.func @transform_6(%arg0: i32) -> (i32, i32, i32) {
    %c0_i32 = arith.constant 0 : i32
    %c0_i32_0 = arith.constant 0 : i32
    %c0_i32_1 = arith.constant 0 : i32
    return %arg0, %c0_i32, %c0_i32_0 : i32, i32, i32
  }
}

</mosaic_0001>

<llo_original>
// kernel: distortion_classifier_forward.1
$region0: #{distortion_classifier_forward.1}
  #allocation0 [shape = 'u32[]', space=smem, size = 0x4, offset = 0x4, fixed_abs, tag = 'smem constant byte address 0x4 - core index']
  #allocation1 [shape = 'u32[144,128]{1,0:T(1,128)}', space=vmem, size = 0x12000, scoped, tag = 'internal scratch']
  #allocation2 [shape = 'bf16[4,26,64]{2,1,0:T(8,128)(2,1)}', space=vmem, size = 0x8000, scoped, tag = 'scratch operand']
  #allocation3 [shape = 'f32[20,128]{1,0:T(8,128)}', space=vmem, size = 0x3000, scoped, tag = 'scratch operand']
  %s0 = inlined_call_operand.hbm [shape: bf16[2,4,26,37], index: 0, kind: input, shape index: {}]
  %s1 = inlined_call_operand.hbm [shape: bf16[37,64], index: 1, kind: input, shape index: {}]
  %s2 = inlined_call_operand.hbm [shape: bf16[9,64,128], index: 2, kind: input, shape index: {}]
  %s3 = inlined_call_operand.hbm [shape: f32[1,128], index: 3, kind: input, shape index: {}]
  %s4 = inlined_call_operand.hbm [shape: bf16[128,128], index: 4, kind: input, shape index: {}]
  %s5 = inlined_call_operand.hbm [shape: f32[1,128], index: 5, kind: input, shape index: {}]
  %s6 = inlined_call_operand.hbm [shape: f32[2,1,128], index: 6, kind: output, shape index: {}]
  %s7 = sld [smem:[#allocation0]]
  $region81: #{distortion_classifier_forward.1} parent=0
    _
  %s9 = ssub.s32 1, %s7
  %s10 = scalar_select 0, %s9, %s7
  $region1: #{distortion_classifier_forward.1} parent=0
    #allocation4 [shape = 'u8[65536]{0}', space=vmem, size = 0x10000, scoped, tag = 'input window, operand 0']
    #allocation5 [shape = 's32[2]{0}', space=sflag, size = 0x8, scoped, tag = 'scoped memory for distortion_classifier_forward.1']
    #allocation6 [shape = 's32[2]{0}', space=sflag, size = 0x8, scoped, tag = 'scoped memory for distortion_classifier_forward.1']
    #allocation7 [shape = 'u8[10240]{0}', space=vmem, size = 0x2800, scoped, tag = 'input window, operand 1, single buffered']
    #allocation8 [shape = 's32[1]{0}', space=sflag, size = 0x4, scoped, tag = 'scoped memory for distortion_classifier_forward.1']
    #allocation9 [shape = 'u8[147456]{0}', space=vmem, size = 0x24000, scoped, tag = 'input window, operand 2, single buffered']
    #allocation10 [shape = 'u8[512]{0}', space=vmem, size = 0x400, scoped, tag = 'input window, operand 3, single buffered']
    #allocation11 [shape = 's32[1]{0}', space=sflag, size = 0x4, scoped, tag = 'scoped memory for distortion_classifier_forward.1']
    #allocation12 [shape = 'u8[32768]{0}', space=vmem, size = 0x8000, scoped, tag = 'input window, operand 4, single buffered']
    #allocation13 [shape = 'u8[512]{0}', space=vmem, size = 0x400, scoped, tag = 'input window, operand 5, single buffered']
    #allocation14 [shape = 's32[1]{0}', space=sflag, size = 0x4, scoped, tag = 'scoped memory for distortion_classifier_forward.1']
    #allocation15 [shape = 'u8[1024]{0}', space=vmem, size = 0x400, scoped, tag = 'output window, operand 0']
    %11 = vsyncpa [#allocation5], 0
    %s12 = scalar_lea.sflag [#allocation5], 1
    %13 = vsyncpa %s12, 0
    %14 = vsyncpa [#allocation8], 0
    %15 = vsyncpa [#allocation11], 0
    %16 = vsyncpa [#allocation14], 0
    %17 = vsyncpa [#allocation6], 0
    %s18 = scalar_lea.sflag [#allocation6], 1
    %19 = vsyncpa %s18, 0
    loop: start=0, step=1, limit=4
    $region2: #{distortion_classifier_forward.1} parent=1 // loop_pre_header
      _
    $region3: #{distortion_classifier_forward.1} parent=1 // loop_header
      %s21 = sphi 0, %s25
      %p22 = scmp.ge.s32.totalorder %s21, 4
      %s31 = sphi 0, %s33
      %s34 = sphi 0, %s31
      %s35 = sphi 0, %s34
      %s51 = sphi 0, %s35
      %s55 = sphi 0, %s55
      %s57 = sphi 0, %s55
      %s58 = sphi 0, %s57
      %s72 = sphi 0, %s58
      %s76 = sphi 0, %s76
      %s78 = sphi 0, %s76
      %s79 = sphi 0, %s78
      %s93 = sphi 0, %s79
      %s97 = sphi 0, %s97
      %s99 = sphi 0, %s97
      %s100 = sphi 0, %s99
      %s114 = sphi 0, %s100
      %s118 = sphi 0, %s118
      %s120 = sphi 0, %s118
      %s121 = sphi 0, %s120
      %s135 = sphi 0, %s121
      %s139 = sphi 0, %s139
      %s141 = sphi 0, %s139
      %s142 = sphi 0, %s141
      %s156 = sphi 0, %s142
      %s162 = sphi 0, %s164
      %s165 = sphi 0, %s162
      %s166 = sphi 0, %s165
      %s182 = sphi 0, %s166
    $region4: #{distortion_classifier_forward.1} parent=1 // loop_header_branch
      %24 = sbr.rel (%p22) target = $region8
    $region5: #{distortion_classifier_forward.1} parent=1 // loop_body
      %s26 = ssub.s32 %s21, 1
      %s27 = ssub.s32 %s21, 2
      %s28 = sadd.s32 %s21, 1
      %s29 = ssub.s32 %s21, %s28
      %p30 = scmp.eq.s32.totalorder %s29, 0
      %s32 = sadd.s32 %s31, 1
      %s33 = scalar_select %p30, %s31, %s32
      %p36 = pneg %p30
      %p37 = scmp.eq.s32.totalorder %s21, 1
      %p38 = por %p36, %p37
      %p39 = scmp.ne.s32.totalorder %s31, %s34
      %p40 = scmp.eq.s32.totalorder %s21, 0
      %p41 = por %p39, %p40
      %p42 = scmp.ne.s32.totalorder %s31, %s34
      %p43 = scmp.eq.s32.totalorder %s26, 1
      %p44 = por %p42, %p43
      %p45 = scmp.ne.s32.totalorder %s34, %s35
      %p46 = scmp.eq.s32.totalorder %s26, 0
      %p47 = por %p45, %p46
      %p48 = scmp.ne.s32.totalorder %s34, %s35
      %p49 = scmp.eq.s32.totalorder %s27, 1
      %p50 = por %p48, %p49
      %p52 = scmp.ne.s32.totalorder %s35, %s51
      %p53 = scmp.eq.s32.totalorder %s27, 0
      %p54 = por %p52, %p53
      %s56 = sadd.s32 %s55, 1
      %p59 = scmp.eq.s32.totalorder %s21, 1
      %p60 = scmp.ne.s32.totalorder %s55, %s57
      %p61 = scmp.eq.s32.totalorder %s21, 0
      %p62 = por %p60, %p61
      %p63 = scmp.ne.s32.totalorder %s55, %s57
      %p64 = scmp.eq.s32.totalorder %s26, 1
      %p65 = por %p63, %p64
      %p66 = scmp.ne.s32.totalorder %s57, %s58
      %p67 = scmp.eq.s32.totalorder %s26, 0
      %p68 = por %p66, %p67
      %p69 = scmp.ne.s32.totalorder %s57, %s58
      %p70 = scmp.eq.s32.totalorder %s27, 1
      %p71 = por %p69, %p70
      %p73 = scmp.ne.s32.totalorder %s58, %s72
      %p74 = scmp.eq.s32.totalorder %s27, 0
      %p75 = por %p73, %p74
      %s77 = sadd.s32 %s76, 1
      %p80 = scmp.eq.s32.totalorder %s21, 1
      %p81 = scmp.ne.s32.totalorder %s76, %s78
      %p82 = scmp.eq.s32.totalorder %s21, 0
      %p83 = por %p81, %p82
      %p84 = scmp.ne.s32.totalorder %s76, %s78
      %p85 = scmp.eq.s32.totalorder %s26, 1
      %p86 = por %p84, %p85
      %p87 = scmp.ne.s32.totalorder %s78, %s79
      %p88 = scmp.eq.s32.totalorder %s26, 0
      %p89 = por %p87, %p88
      %p90 = scmp.ne.s32.totalorder %s78, %s79
      %p91 = scmp.eq.s32.totalorder %s27, 1
      %p92 = por %p90, %p91
      %p94 = scmp.ne.s32.totalorder %s79, %s93
      %p95 = scmp.eq.s32.totalorder %s27, 0
      %p96 = por %p94, %p95
      %s98 = sadd.s32 %s97, 1
      %p101 = scmp.eq.s32.totalorder %s21, 1
      %p102 = scmp.ne.s32.totalorder %s97, %s99
      %p103 = scmp.eq.s32.totalorder %s21, 0
      %p104 = por %p102, %p103
      %p105 = scmp.ne.s32.totalorder %s97, %s99
      %p106 = scmp.eq.s32.totalorder %s26, 1
      %p107 = por %p105, %p106
      %p108 = scmp.ne.s32.totalorder %s99, %s100
      %p109 = scmp.eq.s32.totalorder %s26, 0
      %p110 = por %p108, %p109
      %p111 = scmp.ne.s32.totalorder %s99, %s100
      %p112 = scmp.eq.s32.totalorder %s27, 1
      %p113 = por %p111, %p112
      %p115 = scmp.ne.s32.totalorder %s100, %s114
      %p116 = scmp.eq.s32.totalorder %s27, 0
      %p117 = por %p115, %p116
      %s119 = sadd.s32 %s118, 1
      %p122 = scmp.eq.s32.totalorder %s21, 1
      %p123 = scmp.ne.s32.totalorder %s118, %s120
      %p124 = scmp.eq.s32.totalorder %s21, 0
      %p125 = por %p123, %p124
      %p126 = scmp.ne.s32.totalorder %s118, %s120
      %p127 = scmp.eq.s32.totalorder %s26, 1
      %p128 = por %p126, %p127
      %p129 = scmp.ne.s32.totalorder %s120, %s121
      %p130 = scmp.eq.s32.totalorder %s26, 0
      %p131 = por %p129, %p130
      %p132 = scmp.ne.s32.totalorder %s120, %s121
      %p133 = scmp.eq.s32.totalorder %s27, 1
      %p134 = por %p132, %p133
      %p136 = scmp.ne.s32.totalorder %s121, %s135
      %p137 = scmp.eq.s32.totalorder %s27, 0
      %p138 = por %p136, %p137
      %s140 = sadd.s32 %s139, 1
      %p143 = scmp.eq.s32.totalorder %s21, 1
      %p144 = scmp.ne.s32.totalorder %s139, %s141
      %p145 = scmp.eq.s32.totalorder %s21, 0
      %p146 = por %p144, %p145
      %p147 = scmp.ne.s32.totalorder %s139, %s141
      %p148 = scmp.eq.s32.totalorder %s26, 1
      %p149 = por %p147, %p148
      %p150 = scmp.ne.s32.totalorder %s141, %s142
      %p151 = scmp.eq.s32.totalorder %s26, 0
      %p152 = por %p150, %p151
      %p153 = scmp.ne.s32.totalorder %s141, %s142
      %p154 = scmp.eq.s32.totalorder %s27, 1
      %p155 = por %p153, %p154
      %p157 = scmp.ne.s32.totalorder %s142, %s156
      %p158 = scmp.eq.s32.totalorder %s27, 0
      %p159 = por %p157, %p158
      %s160 = ssub.s32 %s21, %s28
      %p161 = scmp.eq.s32.totalorder %s160, 0
      %s163 = sadd.s32 %s162, 1
      %s164 = scalar_select %p161, %s162, %s163
      %p167 = pneg %p161
      %p168 = scmp.eq.s32.totalorder %s21, 1
      %p169 = por %p167, %p168
      %p170 = scmp.ne.s32.totalorder %s162, %s165
      %p171 = scmp.eq.s32.totalorder %s21, 0
      %p172 = por %p170, %p171
      %p173 = scmp.ne.s32.totalorder %s162, %s165
      %p174 = scmp.eq.s32.totalorder %s26, 1
      %p175 = por %p173, %p174
      %p176 = scmp.ne.s32.totalorder %s165, %s166
      %p177 = scmp.eq.s32.totalorder %s26, 0
      %p178 = por %p176, %p177
      %p179 = scmp.ne.s32.totalorder %s165, %s166
      %p180 = scmp.eq.s32.totalorder %s27, 1
      %p181 = por %p179, %p180
      %p183 = scmp.ne.s32.totalorder %s166, %s182
      %p184 = scmp.eq.s32.totalorder %s27, 0
      %p185 = por %p183, %p184
      %p186 = scmp.le.s32.totalorder 1, %s21
      %p187 = scmp.lt.s32.totalorder %s21, 3
      %p188 = pnand %p186, %p187
      %p189 = pneg %p188
      // Predicated region
      $region9: #{distortion_classifier_forward.1} parent=5 // pred_check
        _
      $region10: #{distortion_classifier_forward.1} parent=5 // pred_check_branch
        %191 = sbr.rel (%p188) target = $region12
      $region11: #{distortion_classifier_forward.1} parent=5 // pred_region
        %s192 = ssub.s32 %s21, 1
        // Predicated region
        $region13: #{distortion_classifier_forward.1} parent=11 // pred_check
          %p193 = pneg %p68
        $region14: #{distortion_classifier_forward.1} parent=11 // pred_check_branch
          %195 = sbr.rel (%p193) target = $region16
        $region15: #{distortion_classifier_forward.1} parent=11 // pred_region
          %s197 = ssub.s32 320, 320
          %198 = vsyncadd [#allocation8], %s197
          %s199 = sshll.u32 [#allocation7], 4
          %s200 = int_to_ptr.vmem [resolvable:$true] %s199
          %205 = dma.hbm_to_vmem [thread:$0]  %s1, 320, %s200, [#allocation8], 64, 64, 4
        $region16: #{distortion_classifier_forward.1} parent=11 // pred_fallthru
          _
        // Predicated region
        $region17: #{distortion_classifier_forward.1} parent=11 // pred_check
          %p206 = pneg %p89
        $region18: #{distortion_classifier_forward.1} parent=11 // pred_check_branch
          %208 = sbr.rel (%p206) target = $region20
        $region19: #{distortion_classifier_forward.1} parent=11 // pred_region
          %s210 = ssub.s32 4608, 4608
          %211 = vsyncadd [#allocation8], %s210
          %s212 = sshll.u32 [#allocation9], 4
          %s213 = int_to_ptr.vmem [resolvable:$true] %s212
          %218 = dma.hbm_to_vmem [thread:$0]  %s2, 4608, %s213, [#allocation8], 64, 64, 4
        $region20: #{distortion_classifier_forward.1} parent=11 // pred_fallthru
          _
        // Predicated region
        $region21: #{distortion_classifier_forward.1} parent=11 // pred_check
          %p219 = pneg %p110
        $region22: #{distortion_classifier_forward.1} parent=11 // pred_check_branch
          %221 = sbr.rel (%p219) target = $region24
        $region23: #{distortion_classifier_forward.1} parent=11 // pred_region
          %s223 = ssub.s32 16, 16
          %224 = vsyncadd [#allocation11], %s223
          %s226 = sshll.u32 [#allocation10], 4
          %s227 = int_to_ptr.vmem [resolvable:$true] %s226
          %229 = dma.hbm_to_vmem [thread:$0]  %s3, 16, %s227, [#allocation11]
        $region24: #{distortion_classifier_forward.1} parent=11 // pred_fallthru
          _
        // Predicated region
        $region25: #{distortion_classifier_forward.1} parent=11 // pred_check
          %p230 = pneg %p131
        $region26: #{distortion_classifier_forward.1} parent=11 // pred_check_branch
          %232 = sbr.rel (%p230) target = $region28
        $region27: #{distortion_classifier_forward.1} parent=11 // pred_region
          %s234 = ssub.s32 1024, 1024
          %235 = vsyncadd [#allocation11], %s234
          %s236 = sshll.u32 [#allocation12], 4
          %s237 = int_to_ptr.vmem [resolvable:$true] %s236
          %242 = dma.hbm_to_vmem [thread:$0]  %s4, 1024, %s237, [#allocation11], 64, 64, 4
        $region28: #{distortion_classifier_forward.1} parent=11 // pred_fallthru
          _
        // Predicated region
        $region29: #{distortion_classifier_forward.1} parent=11 // pred_check
          %p243 = pneg %p152
        $region30: #{distortion_classifier_forward.1} parent=11 // pred_check_branch
          %245 = sbr.rel (%p243) target = $region32
        $region31: #{distortion_classifier_forward.1} parent=11 // pred_region
          %s247 = ssub.s32 16, 16
          %248 = vsyncadd [#allocation14], %s247
          %s250 = sshll.u32 [#allocation13], 4
          %s251 = int_to_ptr.vmem [resolvable:$true] %s250
          %253 = dma.hbm_to_vmem [thread:$0]  %s5, 16, %s251, [#allocation14]
        $region32: #{distortion_classifier_forward.1} parent=11 // pred_fallthru
          _
      $region12: #{distortion_classifier_forward.1} parent=5 // pred_fallthru
        _
      %p254 = scmp.lt.s32.totalorder %s21, 2
      // Predicated region
      $region33: #{distortion_classifier_forward.1} parent=5 // pred_check
        %p255 = pneg %p254
      $region34: #{distortion_classifier_forward.1} parent=5 // pred_check_branch
        %257 = sbr.rel (%p255) target = $region36
      $region35: #{distortion_classifier_forward.1} parent=5 // pred_region
        // Predicated region
        $region37: #{distortion_classifier_forward.1} parent=35 // pred_check
          %p258 = pneg %p41
        $region38: #{distortion_classifier_forward.1} parent=35 // pred_check_branch
          %260 = sbr.rel (%p258) target = $region40
        $region39: #{distortion_classifier_forward.1} parent=35 // pred_region
          %s261 = sand.u32 %s31, 1
          %s262 = scalar_lea.sflag [#allocation5], %s261
          %s263 = sand.u32 %s31, 1
          %s264 = smul.addr %s263, 64
          %s265 = scalar_lea.vmem [#allocation4], %s264
          %s267 = ssub.s32 1024, 1024
          %268 = vsyncadd %s262, %s267
          %s269 = smul.addr %s21, 16
          %s270 = smul.addr %s269, 64
          %s271 = scalar_lea.hbm %s0, %s270
          %s272 = sshll.u32 %s265, 4
          %s273 = int_to_ptr.vmem [resolvable:$true] %s272
          %278 = dma.hbm_to_vmem [thread:$0]  %s271, 1024, %s273, %s262, 64, 64, 4
        $region40: #{distortion_classifier_forward.1} parent=35 // pred_fallthru
          _
      $region36: #{distortion_classifier_forward.1} parent=5 // pred_fallthru
        _
      %p279 = scmp.le.s32.totalorder 1, %s21
      %p280 = scmp.lt.s32.totalorder %s21, 3
      %p281 = pnand %p279, %p280
      %p282 = pneg %p281
      // Predicated region
      $region41: #{distortion_classifier_forward.1} parent=5 // pred_check
        _
      $region42: #{distortion_classifier_forward.1} parent=5 // pred_check_branch
        %284 = sbr.rel (%p281) target = $region44
      $region43: #{distortion_classifier_forward.1} parent=5 // pred_region
        %s285 = ssub.s32 %s21, 1
        %s286 = sand.u32 %s34, 1
        %s287 = scalar_lea.sflag [#allocation5], %s286
        %s288 = sand.u32 %s34, 1
        %s289 = smul.addr %s288, 64
        %s290 = scalar_lea.vmem [#allocation4], %s289
        // Predicated region
        $region45: #{distortion_classifier_forward.1} parent=43 // pred_check
          %p291 = pneg %p47
        $region46: #{distortion_classifier_forward.1} parent=43 // pred_check_branch
          %293 = sbr.rel (%p291) target = $region48
        $region47: #{distortion_classifier_forward.1} parent=43 // pred_region
          %294 = dma.done %s287, 1024
        $region48: #{distortion_classifier_forward.1} parent=43 // pred_fallthru
          _
        // Predicated region
        $region49: #{distortion_classifier_forward.1} parent=43 // pred_check
          %p295 = pneg %p68
        $region50: #{distortion_classifier_forward.1} parent=43 // pred_check_branch
          %297 = sbr.rel (%p295) target = $region52
        $region51: #{distortion_classifier_forward.1} parent=43 // pred_region
          %298 = dma.done [#allocation8], 320
        $region52: #{distortion_classifier_forward.1} parent=43 // pred_fallthru
          _
        // Predicated region
        $region53: #{distortion_classifier_forward.1} parent=43 // pred_check
          %p299 = pneg %p89
        $region54: #{distortion_classifier_forward.1} parent=43 // pred_check_branch
          %301 = sbr.rel (%p299) target = $region56
        $region55: #{distortion_classifier_forward.1} parent=43 // pred_region
          %302 = dma.done [#allocation8], 4608
        $region56: #{distortion_classifier_forward.1} parent=43 // pred_fallthru
          _
        // Predicated region
        $region57: #{distortion_classifier_forward.1} parent=43 // pred_check
          %p303 = pneg %p110
        $region58: #{distortion_classifier_forward.1} parent=43 // pred_check_branch
          %305 = sbr.rel (%p303) target = $region60
        $region59: #{distortion_classifier_forward.1} parent=43 // pred_region
          %306 = dma.done [#allocation11], 16
        $region60: #{distortion_classifier_forward.1} parent=43 // pred_fallthru
          _
        // Predicated region
        $region61: #{distortion_classifier_forward.1} parent=43 // pred_check
          %p307 = pneg %p131
        $region62: #{distortion_classifier_forward.1} parent=43 // pred_check_branch
          %309 = sbr.rel (%p307) target = $region64
        $region63: #{distortion_classifier_forward.1} parent=43 // pred_region
          %310 = dma.done [#allocation11], 1024
        $region64: #{distortion_classifier_forward.1} parent=43 // pred_fallthru
          _
        // Predicated region
        $region65: #{distortion_classifier_forward.1} parent=43 // pred_check
          %p311 = pneg %p152
        $region66: #{distortion_classifier_forward.1} parent=43 // pred_check_branch
          %313 = sbr.rel (%p311) target = $region68
        $region67: #{distortion_classifier_forward.1} parent=43 // pred_region
          %314 = dma.done [#allocation14], 16
        $region68: #{distortion_classifier_forward.1} parent=43 // pred_fallthru
          _
        %s315 = sand.u32 %s34, 1
        %s316 = scalar_lea.sflag [#allocation5], %s315
        %s317 = sand.u32 %s34, 1
        %s318 = smul.addr %s317, 64
        %s319 = scalar_lea.vmem [#allocation4], %s318
        %p320 = pneg %p47
        %p321 = pneg %p44
        %p322 = pneg %p68
        %p323 = pneg %p65
        %p324 = pneg %p89
        %p325 = pneg %p86
        %p326 = pneg %p110
        %p327 = pneg %p107
        %p328 = pneg %p131
        %p329 = pneg %p128
        %p330 = pneg %p152
        %p331 = pneg %p149
        %p332 = pneg %p178
        %p333 = pneg %p175
        %s334 = sand.u32 %s165, 1
        %s335 = scalar_lea.sflag [#allocation6], %s334
        %s336 = sand.u32 %s165, 1
        %s337 = scalar_lea.vmem [#allocation15], %s336
        %v339 = vld [vmem:[%s290] sm:$0xf]
        %v340 = vld [vmem:[%s290 + $0x4] sm:$0xf]
        %v341 = vld [vmem:[%s290 + $0x8] sm:$0xf]
        %v342 = vld [vmem:[%s290 + $0xc] sm:$0x1]
        %v343 = vld [vmem:[#allocation7] sm:$0xf]
        %v344 = vld [vmem:[#allocation7 + $0x4] sm:$0xf]
        %v345 = vld [vmem:[#allocation7 + $0x8] sm:$0xf]
        %v346 = vld [vmem:[#allocation7 + $0xc] sm:$0xf]
        %v347 = vld [vmem:[#allocation7 + $0x10] sm:$0x7]
        %v352 = vunpack.c.l.b16 %v339
        %v353 = vunpack.c.l.b16 %v340
        %v354 = vunpack.c.l.b16 %v341
        %v355 = vunpack.c.l.b16 %v342
        %v356 = vpack.c.b16 %v353, %v352
        %v357 = vpack.c.b16 %v355, %v354
        %v363 = vunpack.c.l.b16 %v343
        %v364 = vunpack.c.l.b16 %v344
        %v365 = vunpack.c.l.b16 %v345
        %v366 = vunpack.c.l.b16 %v346
        %v367 = vunpack.c.l.b16 %v347
        %v368 = vpack.c.b16 %v364, %v363
        %v369 = vpack.c.b16 %v366, %v365
        %v370 = vpack.c.b16 %v367, %v367
        %vm373 = vcmask 302080
        %v375 = vsel %vm373, %v356, 0
        %v378 = vsel %vm373, %v357, 0
        %vm380 = vcmask 1041408
        %vm381 = vcmask 1042432
        %v382 = vsel %vm380, 4294967295, 65535
        %v383 = vsel %vm381, %v382, 0
        %v385 = vand.u32 %v370, %v383
        %387 = vmatprep.subr.bf16.mxu0 0
        %388 = vmatpush1.bf16.msra.mxu0 %v368
        %389 = vmatprep.subr.bf16.mxu0 0
        %390 = vmatpush1.bf16.msra.mxu0 %v369
        %391 = vmatprep.subr.bf16.mxu0 0
        %392 = vmatpush1.bf16.msra.mxu0 %v385
        %393 = vmatprep.subr.bf16.mxu0 0
        %394 = vmatpush1.bf16.msra.mxu0 0
        %395 = vmatprep.subr.bf16.mxu0 0
        %396 = vmatpush1.bf16.msra.mxu0 0
        %397 = vmatprep.subr.bf16.mxu0 0
        %398 = vmatpush1.bf16.msra.mxu0 0
        %399 = vmatprep.subr.bf16.mxu0 0
        %400 = vmatpush1.bf16.msra.mxu0 0
        %401 = vmatprep.subr.bf16.mxu0 0
        %402 = vmatpush1.bf16.msra.mxu0 0
        %403 = vmatprep.subr.bf16.mxu0 0
        %404 = vmatpush1.bf16.msra.mxu0 0
        %405 = vmatprep.subr.bf16.mxu0 0
        %406 = vmatpush1.bf16.msra.mxu0 0
        %407 = vmatprep.subr.bf16.mxu0 0
        %408 = vmatpush1.bf16.msra.mxu0 0
        %409 = vmatprep.subr.bf16.mxu0 0
        %410 = vmatpush1.bf16.msra.mxu0 0
        %411 = vmatprep.subr.bf16.mxu0 0
        %412 = vmatpush1.bf16.msra.mxu0 0
        %413 = vmatprep.subr.bf16.mxu0 0
        %414 = vmatpush1.bf16.msra.mxu0 0
        %415 = vmatprep.subr.bf16.mxu0 0
        %416 = vmatpush1.bf16.msra.mxu0 0
        %417 = vmatprep.subr.bf16.mxu0 0
        %418 = vmatpush1.bf16.msra.mxu0 0
        %419 = vmatprep.mubr.bf16.mxu0 0
        %420 = vmatmul.mubr.bf16.gmra.mrb[0].mxu0 %v375
        %v421 = vpop.f32.mrb[0].mxu0
        %v422 = vadd.f32 0.0, %v421
        %v423 = vpop.f32.mrb[0].mxu0
        %v424 = vpop.f32.mrb[0].mxu0
        %v425 = vadd.f32 0.0, %v424
        %v426 = vpop.f32.mrb[0].mxu0
        %427 = vmatprep.mubr.bf16.mxu0 0
        %428 = vmatmul.mubr.bf16.gmra.mrb[0].mxu0 %v378
        %v429 = vpop.f32.mrb[0].mxu0
        %v430 = vadd.f32 0.0, %v429
        %v431 = vpop.f32.mrb[0].mxu0
        %v432 = vpop.f32.mrb[0].mxu0
        %v433 = vadd.f32 0.0, %v432
        %v434 = vpop.f32.mrb[0].mxu0
        %435 = vdwg.mxu0
        %v436 = vmax.f32 %v422, 0.0
        %v437 = vmax.f32 %v425, 0.0
        %v438 = vmax.f32 %v430, 0.0
        %v439 = vmax.f32 %v433, 0.0
        %v440 = vpack.c.bf16 %v437, %v436
        %v441 = vpack.c.bf16 %v439, %v438
        %v444 = vunpack.c.l.b16 %v440
        %v445 = vunpack.c.h.b16 %v440
        %v446 = vunpack.c.l.b16 %v441
        %v447 = vunpack.c.h.b16 %v441
        %v448 = vpack.c.b16 %v444, %v444
        %v449 = vpack.c.b16 %v445, %v445
        %v450 = vpack.c.b16 %v446, %v446
        %v451 = vpack.c.b16 %v447, %v447
        %vm456 = vcmask 519168
        %457 = vst.msk [vmem:[#allocation2] sm:$0xf] %vm456, %v448
        %458 = vst.msk [vmem:[#allocation2 + $0x4] sm:$0xf] %vm456, %v449
        %459 = vst.msk [vmem:[#allocation2 + $0x8] sm:$0xf] %vm456, %v450
        %vm460 = vcmask 516096
        %461 = vst.msk [vmem:[#allocation2 + $0xc] sm:$0x1] %vm460, %v451
        %s462 = scalar_lea.vmem %s290, 16 [#allocation4]
        %v463 = vld [vmem:[%s462] sm:$0xf]
        %v464 = vld [vmem:[%s462 + $0x4] sm:$0xf]
        %v465 = vld [vmem:[%s462 + $0x8] sm:$0xf]
        %v466 = vld [vmem:[%s462 + $0xc] sm:$0x1]
        %v467 = vld [vmem:[#allocation7] sm:$0xf]
        %v468 = vld [vmem:[#allocation7 + $0x4] sm:$0xf]
        %v469 = vld [vmem:[#allocation7 + $0x8] sm:$0xf]
        %v470 = vld [vmem:[#allocation7 + $0xc] sm:$0xf]
        %v471 = vld [vmem:[#allocation7 + $0x10] sm:$0x7]
        %v476 = vunpack.c.l.b16 %v463
        %v477 = vunpack.c.l.b16 %v464
        %v478 = vunpack.c.l.b16 %v465
        %v479 = vunpack.c.l.b16 %v466
        %v480 = vpack.c.b16 %v477, %v476
        %v481 = vpack.c.b16 %v479, %v478
        %v487 = vunpack.c.l.b16 %v467
        %v488 = vunpack.c.l.b16 %v468
        %v489 = vunpack.c.l.b16 %v469
        %v490 = vunpack.c.l.b16 %v470
        %v491 = vunpack.c.l.b16 %v471
        %v492 = vpack.c.b16 %v488, %v487
        %v493 = vpack.c.b16 %v490, %v489
        %v494 = vpack.c.b16 %v491, %v491
        %v498 = vsel %vm373, %v480, 0
        %v501 = vsel %vm373, %v481, 0
        %v504 = vand.u32 %v494, %v383
        %506 = vmatprep.subr.bf16.mxu0 0
        %507 = vmatpush1.bf16.msra.mxu0 %v492
        %508 = vmatprep.subr.bf16.mxu0 0
        %509 = vmatpush1.bf16.msra.mxu0 %v493
        %510 = vmatprep.subr.bf16.mxu0 0
        %511 = vmatpush1.bf16.msra.mxu0 %v504
        %512 = vmatprep.subr.bf16.mxu0 0
        %513 = vmatpush1.bf16.msra.mxu0 0
        %514 = vmatprep.subr.bf16.mxu0 0
        %515 = vmatpush1.bf16.msra.mxu0 0
        %516 = vmatprep.subr.bf16.mxu0 0
        %517 = vmatpush1.bf16.msra.mxu0 0
        %518 = vmatprep.subr.bf16.mxu0 0
        %519 = vmatpush1.bf16.msra.mxu0 0
        %520 = vmatprep.subr.bf16.mxu0 0
        %521 = vmatpush1.bf16.msra.mxu0 0
        %522 = vmatprep.subr.bf16.mxu0 0
        %523 = vmatpush1.bf16.msra.mxu0 0
        %524 = vmatprep.subr.bf16.mxu0 0
        %525 = vmatpush1.bf16.msra.mxu0 0
        %526 = vmatprep.subr.bf16.mxu0 0
        %527 = vmatpush1.bf16.msra.mxu0 0
        %528 = vmatprep.subr.bf16.mxu0 0
        %529 = vmatpush1.bf16.msra.mxu0 0
        %530 = vmatprep.subr.bf16.mxu0 0
        %531 = vmatpush1.bf16.msra.mxu0 0
        %532 = vmatprep.subr.bf16.mxu0 0
        %533 = vmatpush1.bf16.msra.mxu0 0
        %534 = vmatprep.subr.bf16.mxu0 0
        %535 = vmatpush1.bf16.msra.mxu0 0
        %536 = vmatprep.subr.bf16.mxu0 0
        %537 = vmatpush1.bf16.msra.mxu0 0
        %538 = vmatprep.mubr.bf16.mxu0 0
        %539 = vmatmul.mubr.bf16.gmra.mrb[0].mxu0 %v498
        %v540 = vpop.f32.mrb[0].mxu0
        %v541 = vadd.f32 0.0, %v540
        %v542 = vpop.f32.mrb[0].mxu0
        %v543 = vpop.f32.mrb[0].mxu0
        %v544 = vadd.f32 0.0, %v543
        %v545 = vpop.f32.mrb[0].mxu0
        %546 = vmatprep.mubr.bf16.mxu0 0
        %547 = vmatmul.mubr.bf16.gmra.mrb[0].mxu0 %v501
        %v548 = vpop.f32.mrb[0].mxu0
        %v549 = vadd.f32 0.0, %v548
        %v550 = vpop.f32.mrb[0].mxu0
        %v551 = vpop.f32.mrb[0].mxu0
        %v552 = vadd.f32 0.0, %v551
        %v553 = vpop.f32.mrb[0].mxu0
        %554 = vdwg.mxu0
        %v555 = vmax.f32 %v541, 0.0
        %v556 = vmax.f32 %v544, 0.0
        %v557 = vmax.f32 %v549, 0.0
        %v558 = vmax.f32 %v552, 0.0
        %v559 = vpack.c.bf16 %v556, %v555
        %v560 = vpack.c.bf16 %v558, %v557
        %v563 = vunpack.c.l.b16 %v559
        %v564 = vunpack.c.h.b16 %v559
        %v565 = vunpack.c.l.b16 %v560
        %v566 = vunpack.c.h.b16 %v560
        %v567 = vpack.c.b16 %v563, %v563
        %v568 = vpack.c.b16 %v564, %v564
        %v569 = vpack.c.b16 %v565, %v565
        %v570 = vpack.c.b16 %v566, %v566
        %s575 = scalar_lea.vmem [#allocation2], 16
        %576 = vst.msk [vmem:[%s575] sm:$0xf] %vm456, %v567
        %577 = vst.msk [vmem:[%s575 + $0x4] sm:$0xf] %vm456, %v568
        %578 = vst.msk [vmem:[%s575 + $0x8] sm:$0xf] %vm456, %v569
        %579 = vst.msk [vmem:[%s575 + $0xc] sm:$0x1] %vm460, %v570
        %s580 = scalar_lea.vmem %s290, 32 [#allocation4]
        %v581 = vld [vmem:[%s580] sm:$0xf]
        %v582 = vld [vmem:[%s580 + $0x4] sm:$0xf]
        %v583 = vld [vmem:[%s580 + $0x8] sm:$0xf]
        %v584 = vld [vmem:[%s580 + $0xc] sm:$0x1]
        %v585 = vld [vmem:[#allocation7] sm:$0xf]
        %v586 = vld [vmem:[#allocation7 + $0x4] sm:$0xf]
        %v587 = vld [vmem:[#allocation7 + $0x8] sm:$0xf]
        %v588 = vld [vmem:[#allocation7 + $0xc] sm:$0xf]
        %v589 = vld [vmem:[#allocation7 + $0x10] sm:$0x7]
        %v594 = vunpack.c.l.b16 %v581
        %v595 = vunpack.c.l.b16 %v582
        %v596 = vunpack.c.l.b16 %v583
        %v597 = vunpack.c.l.b16 %v584
        %v598 = vpack.c.b16 %v595, %v594
        %v599 = vpack.c.b16 %v597, %v596
        %v605 = vunpack.c.l.b16 %v585
        %v606 = vunpack.c.l.b16 %v586
        %v607 = vunpack.c.l.b16 %v587
        %v608 = vunpack.c.l.b16 %v588
        %v609 = vunpack.c.l.b16 %v589
        %v610 = vpack.c.b16 %v606, %v605
        %v611 = vpack.c.b16 %v608, %v607
        %v612 = vpack.c.b16 %v609, %v609
        %v616 = vsel %vm373, %v598, 0
        %v619 = vsel %vm373, %v599, 0
        %v622 = vand.u32 %v612, %v383
        %624 = vmatprep.subr.bf16.mxu0 0
        %625 = vmatpush1.bf16.msra.mxu0 %v610
        %626 = vmatprep.subr.bf16.mxu0 0
        %627 = vmatpush1.bf16.msra.mxu0 %v611
        %628 = vmatprep.subr.bf16.mxu0 0
        %629 = vmatpush1.bf16.msra.mxu0 %v622
        %630 = vmatprep.subr.bf16.mxu0 0
        %631 = vmatpush1.bf16.msra.mxu0 0
        %632 = vmatprep.subr.bf16.mxu0 0
        %633 = vmatpush1.bf16.msra.mxu0 0
        %634 = vmatprep.subr.bf16.mxu0 0
        %635 = vmatpush1.bf16.msra.mxu0 0
        %636 = vmatprep.subr.bf16.mxu0 0
        %637 = vmatpush1.bf16.msra.mxu0 0
        %638 = vmatprep.subr.bf16.mxu0 0
        %639 = vmatpush1.bf16.msra.mxu0 0
        %640 = vmatprep.subr.bf16.mxu0 0
        %641 = vmatpush1.bf16.msra.mxu0 0
        %642 = vmatprep.subr.bf16.mxu0 0
        %643 = vmatpush1.bf16.msra.mxu0 0
        %644 = vmatprep.subr.bf16.mxu0 0
        %645 = vmatpush1.bf16.msra.mxu0 0
        %646 = vmatprep.subr.bf16.mxu0 0
        %647 = vmatpush1.bf16.msra.mxu0 0
        %648 = vmatprep.subr.bf16.mxu0 0
        %649 = vmatpush1.bf16.msra.mxu0 0
        %650 = vmatprep.subr.bf16.mxu0 0
        %651 = vmatpush1.bf16.msra.mxu0 0
        %652 = vmatprep.subr.bf16.mxu0 0
        %653 = vmatpush1.bf16.msra.mxu0 0
        %654 = vmatprep.subr.bf16.mxu0 0
        %655 = vmatpush1.bf16.msra.mxu0 0
        %656 = vmatprep.mubr.bf16.mxu0 0
        %657 = vmatmul.mubr.bf16.gmra.mrb[0].mxu0 %v616
        %v658 = vpop.f32.mrb[0].mxu0
        %v659 = vadd.f32 0.0, %v658
        %v660 = vpop.f32.mrb[0].mxu0
        %v661 = vpop.f32.mrb[0].mxu0
        %v662 = vadd.f32 0.0, %v661
        %v663 = vpop.f32.mrb[0].mxu0
        %664 = vmatprep.mubr.bf16.mxu0 0
        %665 = vmatmul.mubr.bf16.gmra.mrb[0].mxu0 %v619
        %v666 = vpop.f32.mrb[0].mxu0
        %v667 = vadd.f32 0.0, %v666
        %v668 = vpop.f32.mrb[0].mxu0
        %v669 = vpop.f32.mrb[0].mxu0
        %v670 = vadd.f32 0.0, %v669
        %v671 = vpop.f32.mrb[0].mxu0
        %672 = vdwg.mxu0
        %v673 = vmax.f32 %v659, 0.0
        %v674 = vmax.f32 %v662, 0.0
        %v675 = vmax.f32 %v667, 0.0
        %v676 = vmax.f32 %v670, 0.0
        %v677 = vpack.c.bf16 %v674, %v673
        %v678 = vpack.c.bf16 %v676, %v675
        %v681 = vunpack.c.l.b16 %v677
        %v682 = vunpack.c.h.b16 %v677
        %v683 = vunpack.c.l.b16 %v678
        %v684 = vunpack.c.h.b16 %v678
        %v685 = vpack.c.b16 %v681, %v681
        %v686 = vpack.c.b16 %v682, %v682
        %v687 = vpack.c.b16 %v683, %v683
        %v688 = vpack.c.b16 %v684, %v684
        %s693 = scalar_lea.vmem [#allocation2], 32
        %694 = vst.msk [vmem:[%s693] sm:$0xf] %vm456, %v685
        %695 = vst.msk [vmem:[%s693 + $0x4] sm:$0xf] %vm456, %v686
        %696 = vst.msk [vmem:[%s693 + $0x8] sm:$0xf] %vm456, %v687
        %697 = vst.msk [vmem:[%s693 + $0xc] sm:$0x1] %vm460, %v688
        %s698 = scalar_lea.vmem %s290, 48 [#allocation4]
        %v699 = vld [vmem:[%s698] sm:$0xf]
        %v700 = vld [vmem:[%s698 + $0x4] sm:$0xf]
        %v701 = vld [vmem:[%s698 + $0x8] sm:$0xf]
        %v702 = vld [vmem:[%s698 + $0xc] sm:$0x1]
        %v703 = vld [vmem:[#allocation7] sm:$0xf]
        %v704 = vld [vmem:[#allocation7 + $0x4] sm:$0xf]
        %v705 = vld [vmem:[#allocation7 + $0x8] sm:$0xf]
        %v706 = vld [vmem:[#allocation7 + $0xc] sm:$0xf]
        %v707 = vld [vmem:[#allocation7 + $0x10] sm:$0x7]
        %v712 = vunpack.c.l.b16 %v699
        %v713 = vunpack.c.l.b16 %v700
        %v714 = vunpack.c.l.b16 %v701
        %v715 = vunpack.c.l.b16 %v702
        %v716 = vpack.c.b16 %v713, %v712
        %v717 = vpack.c.b16 %v715, %v714
        %v723 = vunpack.c.l.b16 %v703
        %v724 = vunpack.c.l.b16 %v704
        %v725 = vunpack.c.l.b16 %v705
        %v726 = vunpack.c.l.b16 %v706
        %v727 = vunpack.c.l.b16 %v707
        %v728 = vpack.c.b16 %v724, %v723
        %v729 = vpack.c.b16 %v726, %v725
        %v730 = vpack.c.b16 %v727, %v727
        %v734 = vsel %vm373, %v716, 0
        %v737 = vsel %vm373, %v717, 0
        %v740 = vand.u32 %v730, %v383
        %742 = vmatprep.subr.bf16.mxu0 0
        %743 = vmatpush1.bf16.msra.mxu0 %v728
        %744 = vmatprep.subr.bf16.mxu0 0
        %745 = vmatpush1.bf16.msra.mxu0 %v729
        %746 = vmatprep.subr.bf16.mxu0 0
        %747 = vmatpush1.bf16.msra.mxu0 %v740
        %748 = vmatprep.subr.bf16.mxu0 0
        %749 = vmatpush1.bf16.msra.mxu0 0
        %750 = vmatprep.subr.bf16.mxu0 0
        %751 = vmatpush1.bf16.msra.mxu0 0
        %752 = vmatprep.subr.bf16.mxu0 0
        %753 = vmatpush1.bf16.msra.mxu0 0
        %754 = vmatprep.subr.bf16.mxu0 0
        %755 = vmatpush1.bf16.msra.mxu0 0
        %756 = vmatprep.subr.bf16.mxu0 0
        %757 = vmatpush1.bf16.msra.mxu0 0
        %758 = vmatprep.subr.bf16.mxu0 0
        %759 = vmatpush1.bf16.msra.mxu0 0
        %760 = vmatprep.subr.bf16.mxu0 0
        %761 = vmatpush1.bf16.msra.mxu0 0
        %762 = vmatprep.subr.bf16.mxu0 0
        %763 = vmatpush1.bf16.msra.mxu0 0
        %764 = vmatprep.subr.bf16.mxu0 0
        %765 = vmatpush1.bf16.msra.mxu0 0
        %766 = vmatprep.subr.bf16.mxu0 0
        %767 = vmatpush1.bf16.msra.mxu0 0
        %768 = vmatprep.subr.bf16.mxu0 0
        %769 = vmatpush1.bf16.msra.mxu0 0
        %770 = vmatprep.subr.bf16.mxu0 0
        %771 = vmatpush1.bf16.msra.mxu0 0
        %772 = vmatprep.subr.bf16.mxu0 0
        %773 = vmatpush1.bf16.msra.mxu0 0
        %774 = vmatprep.mubr.bf16.mxu0 0
        %775 = vmatmul.mubr.bf16.gmra.mrb[0].mxu0 %v734
        %v776 = vpop.f32.mrb[0].mxu0
        %v777 = vadd.f32 0.0, %v776
        %v778 = vpop.f32.mrb[0].mxu0
        %v779 = vpop.f32.mrb[0].mxu0
        %v780 = vadd.f32 0.0, %v779
        %v781 = vpop.f32.mrb[0].mxu0
        %782 = vmatprep.mubr.bf16.mxu0 0
        %783 = vmatmul.mubr.bf16.gmra.mrb[0].mxu0 %v737
        %v784 = vpop.f32.mrb[0].mxu0
        %v785 = vadd.f32 0.0, %v784
        %v786 = vpop.f32.mrb[0].mxu0
        %v787 = vpop.f32.mrb[0].mxu0
        %v788 = vadd.f32 0.0, %v787
        %v789 = vpop.f32.mrb[0].mxu0
        %790 = vdwg.mxu0
        %v791 = vmax.f32 %v777, 0.0
        %v792 = vmax.f32 %v780, 0.0
        %v793 = vmax.f32 %v785, 0.0
        %v794 = vmax.f32 %v788, 0.0
        %v795 = vpack.c.bf16 %v792, %v791
        %v796 = vpack.c.bf16 %v794, %v793
        %v799 = vunpack.c.l.b16 %v795
        %v800 = vunpack.c.h.b16 %v795
        %v801 = vunpack.c.l.b16 %v796
        %v802 = vunpack.c.h.b16 %v796
        %v803 = vpack.c.b16 %v799, %v799
        %v804 = vpack.c.b16 %v800, %v800
        %v805 = vpack.c.b16 %v801, %v801
        %v806 = vpack.c.b16 %v802, %v802
        %s811 = scalar_lea.vmem [#allocation2], 48
        %812 = vst.msk [vmem:[%s811] sm:$0xf] %vm456, %v803
        %813 = vst.msk [vmem:[%s811 + $0x4] sm:$0xf] %vm456, %v804
        %814 = vst.msk [vmem:[%s811 + $0x8] sm:$0xf] %vm456, %v805
        %815 = vst.msk [vmem:[%s811 + $0xc] sm:$0x1] %vm460, %v806
        %v816 = vld [vmem:[#allocation2] sm:$0xf]
        %v817 = vld [vmem:[#allocation2 + $0x4] sm:$0xf]
        %v818 = vld [vmem:[#allocation2 + $0x8] sm:$0x3]
        %v819 = vld [vmem:[#allocation9] sm:$0xf]
        %v820 = vld [vmem:[#allocation9 + $0x4] sm:$0xf]
        %v821 = vld [vmem:[#allocation9 + $0x8] sm:$0xf]
        %v822 = vld [vmem:[#allocation9 + $0xc] sm:$0xf]
        %v823 = vld [vmem:[#allocation9 + $0x10] sm:$0xf]
        %v824 = vld [vmem:[#allocation9 + $0x14] sm:$0xf]
        %v825 = vld [vmem:[#allocation9 + $0x18] sm:$0xf]
        %v826 = vld [vmem:[#allocation9 + $0x1c] sm:$0xf]
        %v830 = vunpack.c.l.b16 %v816
        %v831 = vunpack.c.l.b16 %v817
        %v832 = vunpack.c.l.b16 %v818
        %v833 = vpack.c.b16 %v831, %v830
        %v834 = vpack.c.b16 %v832, %v832
        %v843 = vunpack.c.l.b16 %v819
        %v844 = vunpack.c.l.b16 %v820
        %v845 = vunpack.c.l.b16 %v821
        %v846 = vunpack.c.l.b16 %v822
        %v847 = vunpack.c.l.b16 %v823
        %v848 = vunpack.c.l.b16 %v824
        %v849 = vunpack.c.l.b16 %v825
        %v850 = vunpack.c.l.b16 %v826
        %v851 = vpack.c.b16 %v844, %v843
        %v852 = vpack.c.b16 %v846, %v845
        %v853 = vpack.c.b16 %v848, %v847
        %v854 = vpack.c.b16 %v850, %v849
        %vm859 = vcmask 523264
        %v861 = vsel %vm859, %v833, 0
        %v864 = vsel %vm859, %v834, 0
        %866 = vmatprep.subr.bf16.mxu0 0
        %867 = vmatpush1.bf16.msra.mxu0 %v851
        %868 = vmatprep.subr.bf16.mxu0 0
        %869 = vmatpush1.bf16.msra.mxu0 %v852
        %870 = vmatprep.subr.bf16.mxu0 0
        %871 = vmatpush1.bf16.msra.mxu0 %v853
        %872 = vmatprep.subr.bf16.mxu0 0
        %873 = vmatpush1.bf16.msra.mxu0 %v854
        %874 = vmatprep.subr.bf16.mxu0 0
        %875 = vmatpush1.bf16.msra.mxu0 0
        %876 = vmatprep.subr.bf16.mxu0 0
        %877 = vmatpush1.bf16.msra.mxu0 0
        %878 = vmatprep.subr.bf16.mxu0 0
        %879 = vmatpush1.bf16.msra.mxu0 0
        %880 = vmatprep.subr.bf16.mxu0 0
        %881 = vmatpush1.bf16.msra.mxu0 0
        %882 = vmatprep.subr.bf16.mxu0 0
        %883 = vmatpush1.bf16.msra.mxu0 0
        %884 = vmatprep.subr.bf16.mxu0 0
        %885 = vmatpush1.bf16.msra.mxu0 0
        %886 = vmatprep.subr.bf16.mxu0 0
        %887 = vmatpush1.bf16.msra.mxu0 0
        %888 = vmatprep.subr.bf16.mxu0 0
        %889 = vmatpush1.bf16.msra.mxu0 0
        %890 = vmatprep.subr.bf16.mxu0 0
        %891 = vmatpush1.bf16.msra.mxu0 0
        %892 = vmatprep.subr.bf16.mxu0 0
        %893 = vmatpush1.bf16.msra.mxu0 0
        %894 = vmatprep.subr.bf16.mxu0 0
        %895 = vmatpush1.bf16.msra.mxu0 0
        %896 = vmatprep.subr.bf16.mxu0 0
        %897 = vmatpush1.bf16.msra.mxu0 0
        %898 = vmatprep.mubr.bf16.mxu0 0
        %899 = vmatmul.mubr.bf16.gmra.mrb[0].mxu0 %v861
        %v900 = vpop.f32.mrb[0].mxu0
        %v901 = vadd.f32 0.0, %v900
        %v902 = vpop.f32.mrb[0].mxu0
        %v903 = vpop.f32.mrb[0].mxu0
        %v904 = vadd.f32 0.0, %v903
        %v905 = vpop.f32.mrb[0].mxu0
        %906 = vmatprep.mubr.bf16.mxu0 0
        %907 = vmatmul.mubr.bf16.gmra.mrb[0].mxu0 %v864
        %v908 = vpop.f32.mrb[0].mxu0
        %v909 = vadd.f32 0.0, %v908
        %v910 = vpop.f32.mrb[0].mxu0
        %v911 = vpop.f32.mrb[0].mxu0
        %v912 = vpop.f32.mrb[0].mxu0
        %913 = vdwg.mxu0
        %914 = vst [vmem:[#allocation3] sm:$0xff] %v901
        %915 = vst [vmem:[#allocation3 + $0x8] sm:$0xff] %v904
        %916 = vst [vmem:[#allocation3 + $0x10] sm:$0xf] %v909
        %v917 = vld [vmem:[%s575] sm:$0xf]
        %v918 = vld [vmem:[%s575 + $0x4] sm:$0xf]
        %v919 = vld [vmem:[%s575 + $0x8] sm:$0x3]
        %s920 = scalar_lea.vmem [#allocation9], 32
        %v921 = vld [vmem:[%s920] sm:$0xf]
        %v922 = vld [vmem:[%s920 + $0x4] sm:$0xf]
        %v923 = vld [vmem:[%s920 + $0x8] sm:$0xf]
        %v924 = vld [vmem:[%s920 + $0xc] sm:$0xf]
        %v925 = vld [vmem:[%s920 + $0x10] sm:$0xf]
        %v926 = vld [vmem:[%s920 + $0x14] sm:$0xf]
        %v927 = vld [vmem:[%s920 + $0x18] sm:$0xf]
        %v928 = vld [vmem:[%s920 + $0x1c] sm:$0xf]
        %v932 = vunpack.c.l.b16 %v917
        %v933 = vunpack.c.l.b16 %v918
        %v934 = vunpack.c.l.b16 %v919
        %v935 = vpack.c.b16 %v933, %v932
        %v936 = vpack.c.b16 %v934, %v934
        %v945 = vunpack.c.l.b16 %v921
        %v946 = vunpack.c.l.b16 %v922
        %v947 = vunpack.c.l.b16 %v923
        %v948 = vunpack.c.l.b16 %v924
        %v949 = vunpack.c.l.b16 %v925
        %v950 = vunpack.c.l.b16 %v926
        %v951 = vunpack.c.l.b16 %v927
        %v952 = vunpack.c.l.b16 %v928
        %v953 = vpack.c.b16 %v946, %v945
        %v954 = vpack.c.b16 %v948, %v947
        %v955 = vpack.c.b16 %v950, %v949
        %v956 = vpack.c.b16 %v952, %v951
        %v962 = vsel %vm859, %v935, 0
        %v965 = vsel %vm859, %v936, 0
        %967 = vmatprep.subr.bf16.mxu0 0
        %968 = vmatpush1.bf16.msra.mxu0 %v953
        %969 = vmatprep.subr.bf16.mxu0 0
        %970 = vmatpush1.bf16.msra.mxu0 %v954
        %971 = vmatprep.subr.bf16.mxu0 0
        %972 = vmatpush1.bf16.msra.mxu0 %v955
        %973 = vmatprep.subr.bf16.mxu0 0
        %974 = vmatpush1.bf16.msra.mxu0 %v956
        %975 = vmatprep.subr.bf16.mxu0 0
        %976 = vmatpush1.bf16.msra.mxu0 0
        %977 = vmatprep.subr.bf16.mxu0 0
        %978 = vmatpush1.bf16.msra.mxu0 0
        %979 = vmatprep.subr.bf16.mxu0 0
        %980 = vmatpush1.bf16.msra.mxu0 0
        %981 = vmatprep.subr.bf16.mxu0 0
        %982 = vmatpush1.bf16.msra.mxu0 0
        %983 = vmatprep.subr.bf16.mxu0 0
        %984 = vmatpush1.bf16.msra.mxu0 0
        %985 = vmatprep.subr.bf16.mxu0 0
        %986 = vmatpush1.bf16.msra.mxu0 0
        %987 = vmatprep.subr.bf16.mxu0 0
        %988 = vmatpush1.bf16.msra.mxu0 0
        %989 = vmatprep.subr.bf16.mxu0 0
        %990 = vmatpush1.bf16.msra.mxu0 0
        %991 = vmatprep.subr.bf16.mxu0 0
        %992 = vmatpush1.bf16.msra.mxu0 0
        %993 = vmatprep.subr.bf16.mxu0 0
        %994 = vmatpush1.bf16.msra.mxu0 0
        %995 = vmatprep.subr.bf16.mxu0 0
        %996 = vmatpush1.bf16.msra.mxu0 0
        %997 = vmatprep.subr.bf16.mxu0 0
        %998 = vmatpush1.bf16.msra.mxu0 0
        %999 = vmatprep.mubr.bf16.mxu0 0
        %1000 = vmatmul.mubr.bf16.gmra.mrb[0].mxu0 %v962
        %v1001 = vpop.f32.mrb[0].mxu0
        %v1002 = vadd.f32 0.0, %v1001
        %v1003 = vpop.f32.mrb[0].mxu0
        %v1004 = vpop.f32.mrb[0].mxu0
        %v1005 = vadd.f32 0.0, %v1004
        %v1006 = vpop.f32.mrb[0].mxu0
        %1007 = vmatprep.mubr.bf16.mxu0 0
        %1008 = vmatmul.mubr.bf16.gmra.mrb[0].mxu0 %v965
        %v1009 = vpop.f32.mrb[0].mxu0
        %v1010 = vadd.f32 0.0, %v1009
        %v1011 = vpop.f32.mrb[0].mxu0
        %v1012 = vpop.f32.mrb[0].mxu0
        %v1013 = vpop.f32.mrb[0].mxu0
        %1014 = vdwg.mxu0
        %v1015 = vld [vmem:[#allocation3] sm:$0xff]
        %v1016 = vld [vmem:[#allocation3 + $0x8] sm:$0xff]
        %v1017 = vld [vmem:[#allocation3 + $0x10] sm:$0xf]
        %v1018 = vadd.f32 %v1015, %v1002
        %v1019 = vadd.f32 %v1016, %v1005
        %v1020 = vadd.f32 %v1017, %v1010
        %1021 = vst [vmem:[#allocation3] sm:$0xff] %v1018
        %1022 = vst [vmem:[#allocation3 + $0x8] sm:$0xff] %v1019
        %1023 = vst [vmem:[#allocation3 + $0x10] sm:$0xf] %v1020
        %v1024 = vld [vmem:[#allocation2] sm:$0xf]
        %v1025 = vld [vmem:[#allocation2 + $0x4] sm:$0xf]
        %v1026 = vld [vmem:[#allocation2 + $0x8] sm:$0x7]
        %s1027 = scalar_lea.vmem [#allocation9], 64
        %v1028 = vld [vmem:[%s1027] sm:$0xf]
        %v1029 = vld [vmem:[%s1027 + $0x4] sm:$0xf]
        %v1030 = vld [vmem:[%s1027 + $0x8] sm:$0xf]
        %v1031 = vld [vmem:[%s1027 + $0xc] sm:$0xf]
        %v1032 = vld [vmem:[%s1027 + $0x10] sm:$0xf]
        %v1033 = vld [vmem:[%s1027 + $0x14] sm:$0xf]
        %v1034 = vld [vmem:[%s1027 + $0x18] sm:$0xf]
        %v1035 = vld [vmem:[%s1027 + $0x1c] sm:$0xf]
        %v1039 = vunpack.c.l.b16 %v1024
        %v1040 = vunpack.c.l.b16 %v1025
        %v1041 = vunpack.c.l.b16 %v1026
        %v1042 = vpack.c.b16 %v1040, %v1039
        %v1043 = vpack.c.b16 %v1041, %v1041
        %vm1044 = vsmask.f32 7424
        %v1046 = vshrl.u32 %v1042, 16
        %v1048 = vshll.u32 %v1042, 16
        %v1050 = vrot.slane %v1048, 1
        %v1051 = vor.u32 %v1046, %v1050
        %v1053 = vshll.u32 %v1043, 16
        %v1055 = vrot.slane %v1053, 1
        %v1056 = vsel %vm1044, %v1051, %v1055
        %v1057 = vshrl.u32 %v1043, 16
        %v1059 = vor.u32 %v1057, %v1055
        %v1068 = vunpack.c.l.b16 %v1028
        %v1069 = vunpack.c.l.b16 %v1029
        %v1070 = vunpack.c.l.b16 %v1030
        %v1071 = vunpack.c.l.b16 %v1031
        %v1072 = vunpack.c.l.b16 %v1032
        %v1073 = vunpack.c.l.b16 %v1033
        %v1074 = vunpack.c.l.b16 %v1034
        %v1075 = vunpack.c.l.b16 %v1035
        %v1076 = vpack.c.b16 %v1069, %v1068
        %v1077 = vpack.c.b16 %v1071, %v1070
        %v1078 = vpack.c.b16 %v1073, %v1072
        %v1079 = vpack.c.b16 %v1075, %v1074
        %v1085 = vsel %vm859, %v1056, 0
        %v1088 = vsel %vm859, %v1059, 0
        %1090 = vmatprep.subr.bf16.mxu0 0
        %1091 = vmatpush1.bf16.msra.mxu0 %v1076
        %1092 = vmatprep.subr.bf16.mxu0 0
        %1093 = vmatpush1.bf16.msra.mxu0 %v1077
        %1094 = vmatprep.subr.bf16.mxu0 0
        %1095 = vmatpush1.bf16.msra.mxu0 %v1078
        %1096 = vmatprep.subr.bf16.mxu0 0
        %1097 = vmatpush1.bf16.msra.mxu0 %v1079
        %1098 = vmatprep.subr.bf16.mxu0 0
        %1099 = vmatpush1.bf16.msra.mxu0 0
        %1100 = vmatprep.subr.bf16.mxu0 0
        %1101 = vmatpush1.bf16.msra.mxu0 0
        %1102 = vmatprep.subr.bf16.mxu0 0
        %1103 = vmatpush1.bf16.msra.mxu0 0
        %1104 = vmatprep.subr.bf16.mxu0 0
        %1105 = vmatpush1.bf16.msra.mxu0 0
        %1106 = vmatprep.subr.bf16.mxu0 0
        %1107 = vmatpush1.bf16.msra.mxu0 0
        %1108 = vmatprep.subr.bf16.mxu0 0
        %1109 = vmatpush1.bf16.msra.mxu0 0
        %1110 = vmatprep.subr.bf16.mxu0 0
        %1111 = vmatpush1.bf16.msra.mxu0 0
        %1112 = vmatprep.subr.bf16.mxu0 0
        %1113 = vmatpush1.bf16.msra.mxu0 0
        %1114 = vmatprep.subr.bf16.mxu0 0
        %1115 = vmatpush1.bf16.msra.mxu0 0
        %1116 = vmatprep.subr.bf16.mxu0 0
        %1117 = vmatpush1.bf16.msra.mxu0 0
        %1118 = vmatprep.subr.bf16.mxu0 0
        %1119 = vmatpush1.bf16.msra.mxu0 0
        %1120 = vmatprep.subr.bf16.mxu0 0
        %1121 = vmatpush1.bf16.msra.mxu0 0
        %1122 = vmatprep.mubr.bf16.mxu0 0
        %1123 = vmatmul.mubr.bf16.gmra.mrb[0].mxu0 %v1085
        %v1124 = vpop.f32.mrb[0].mxu0
        %v1125 = vadd.f32 0.0, %v1124
        %v1126 = vpop.f32.mrb[0].mxu0
        %v1127 = vpop.f32.mrb[0].mxu0
        %v1128 = vadd.f32 0.0, %v1127
        %v1129 = vpop.f32.mrb[0].mxu0
        %1130 = vmatprep.mubr.bf16.mxu0 0
        %1131 = vmatmul.mubr.bf16.gmra.mrb[0].mxu0 %v1088
        %v1132 = vpop.f32.mrb[0].mxu0
        %v1133 = vadd.f32 0.0, %v1132
        %v1134 = vpop.f32.mrb[0].mxu0
        %v1135 = vpop.f32.mrb[0].mxu0
        %v1136 = vpop.f32.mrb[0].mxu0
        %1137 = vdwg.mxu0
        %v1138 = vld [vmem:[#allocation3] sm:$0xff]
        %v1139 = vld [vmem:[#allocation3 + $0x8] sm:$0xff]
        %v1140 = vld [vmem:[#allocation3 + $0x10] sm:$0xf]
        %v1141 = vadd.f32 %v1138, %v1125
        %v1142 = vadd.f32 %v1139, %v1128
        %v1143 = vadd.f32 %v1140, %v1133
        %1144 = vst [vmem:[#allocation3] sm:$0xff] %v1141
        %1145 = vst [vmem:[#allocation3 + $0x8] sm:$0xff] %v1142
        %1146 = vst [vmem:[#allocation3 + $0x10] sm:$0xf] %v1143
        %v1147 = vld [vmem:[%s693] sm:$0xf]
        %v1148 = vld [vmem:[%s693 + $0x4] sm:$0xf]
        %v1149 = vld [vmem:[%s693 + $0x8] sm:$0x3]
        %s1150 = scalar_lea.vmem [#allocation9], 96
        %v1151 = vld [vmem:[%s1150] sm:$0xf]
        %v1152 = vld [vmem:[%s1150 + $0x4] sm:$0xf]
        %v1153 = vld [vmem:[%s1150 + $0x8] sm:$0xf]
        %v1154 = vld [vmem:[%s1150 + $0xc] sm:$0xf]
        %v1155 = vld [vmem:[%s1150 + $0x10] sm:$0xf]
        %v1156 = vld [vmem:[%s1150 + $0x14] sm:$0xf]
        %v1157 = vld [vmem:[%s1150 + $0x18] sm:$0xf]
        %v1158 = vld [vmem:[%s1150 + $0x1c] sm:$0xf]
        %v1162 = vunpack.c.l.b16 %v1147
        %v1163 = vunpack.c.l.b16 %v1148
        %v1164 = vunpack.c.l.b16 %v1149
        %v1165 = vpack.c.b16 %v1163, %v1162
        %v1166 = vpack.c.b16 %v1164, %v1164
        %v1175 = vunpack.c.l.b16 %v1151
        %v1176 = vunpack.c.l.b16 %v1152
        %v1177 = vunpack.c.l.b16 %v1153
        %v1178 = vunpack.c.l.b16 %v1154
        %v1179 = vunpack.c.l.b16 %v1155
        %v1180 = vunpack.c.l.b16 %v1156
        %v1181 = vunpack.c.l.b16 %v1157
        %v1182 = vunpack.c.l.b16 %v1158
        %v1183 = vpack.c.b16 %v1176, %v1175
        %v1184 = vpack.c.b16 %v1178, %v1177
        %v1185 = vpack.c.b16 %v1180, %v1179
        %v1186 = vpack.c.b16 %v1182, %v1181
        %v1192 = vsel %vm859, %v1165, 0
        %v1195 = vsel %vm859, %v1166, 0
        %1197 = vmatprep.subr.bf16.mxu0 0
        %1198 = vmatpush1.bf16.msra.mxu0 %v1183
        %1199 = vmatprep.subr.bf16.mxu0 0
        %1200 = vmatpush1.bf16.msra.mxu0 %v1184
        %1201 = vmatprep.subr.bf16.mxu0 0
        %1202 = vmatpush1.bf16.msra.mxu0 %v1185
        %1203 = vmatprep.subr.bf16.mxu0 0
        %1204 = vmatpush1.bf16.msra.mxu0 %v1186
        %1205 = vmatprep.subr.bf16.mxu0 0
        %1206 = vmatpush1.bf16.msra.mxu0 0
        %1207 = vmatprep.subr.bf16.mxu0 0
        %1208 = vmatpush1.bf16.msra.mxu0 0
        %1209 = vmatprep.subr.bf16.mxu0 0
        %1210 = vmatpush1.bf16.msra.mxu0 0
        %1211 = vmatprep.subr.bf16.mxu0 0
        %1212 = vmatpush1.bf16.msra.mxu0 0
        %1213 = vmatprep.subr.bf16.mxu0 0
        %1214 = vmatpush1.bf16.msra.mxu0 0
        %1215 = vmatprep.subr.bf16.mxu0 0
        %1216 = vmatpush1.bf16.msra.mxu0 0
        %1217 = vmatprep.subr.bf16.mxu0 0
        %1218 = vmatpush1.bf16.msra.mxu0 0
        %1219 = vmatprep.subr.bf16.mxu0 0
        %1220 = vmatpush1.bf16.msra.mxu0 0
        %1221 = vmatprep.subr.bf16.mxu0 0
        %1222 = vmatpush1.bf16.msra.mxu0 0
        %1223 = vmatprep.subr.bf16.mxu0 0
        %1224 = vmatpush1.bf16.msra.mxu0 0
        %1225 = vmatprep.subr.bf16.mxu0 0
        %1226 = vmatpush1.bf16.msra.mxu0 0
        %1227 = vmatprep.subr.bf16.mxu0 0
        %1228 = vmatpush1.bf16.msra.mxu0 0
        %1229 = vmatprep.mubr.bf16.mxu0 0
        %1230 = vmatmul.mubr.bf16.gmra.mrb[0].mxu0 %v1192
        %v1231 = vpop.f32.mrb[0].mxu0
        %v1232 = vadd.f32 0.0, %v1231
        %v1233 = vpop.f32.mrb[0].mxu0
        %v1234 = vpop.f32.mrb[0].mxu0
        %v1235 = vadd.f32 0.0, %v1234
        %v1236 = vpop.f32.mrb[0].mxu0
        %1237 = vmatprep.mubr.bf16.mxu0 0
        %1238 = vmatmul.mubr.bf16.gmra.mrb[0].mxu0 %v1195
        %v1239 = vpop.f32.mrb[0].mxu0
        %v1240 = vadd.f32 0.0, %v1239
        %v1241 = vpop.f32.mrb[0].mxu0
        %v1242 = vpop.f32.mrb[0].mxu0
        %v1243 = vpop.f32.mrb[0].mxu0
        %1244 = vdwg.mxu0
        %v1245 = vld [vmem:[#allocation3] sm:$0xff]
        %v1246 = vld [vmem:[#allocation3 + $0x8] sm:$0xff]
        %v1247 = vld [vmem:[#allocation3 + $0x10] sm:$0xf]
        %v1248 = vadd.f32 %v1245, %v1232
        %v1249 = vadd.f32 %v1246, %v1235
        %v1250 = vadd.f32 %v1247, %v1240
        %1251 = vst [vmem:[#allocation3] sm:$0xff] %v1248
        %1252 = vst [vmem:[#allocation3 + $0x8] sm:$0xff] %v1249
        %1253 = vst [vmem:[#allocation3 + $0x10] sm:$0xf] %v1250
        %v1254 = vld [vmem:[%s811] sm:$0xf]
        %v1255 = vld [vmem:[%s811 + $0x4] sm:$0xf]
        %v1256 = vld [vmem:[%s811 + $0x8] sm:$0x3]
        %s1257 = scalar_lea.vmem [#allocation9], 128
        %v1258 = vld [vmem:[%s1257] sm:$0xf]
        %v1259 = vld [vmem:[%s1257 + $0x4] sm:$0xf]
        %v1260 = vld [vmem:[%s1257 + $0x8] sm:$0xf]
        %v1261 = vld [vmem:[%s1257 + $0xc] sm:$0xf]
        %v1262 = vld [vmem:[%s1257 + $0x10] sm:$0xf]
        %v1263 = vld [vmem:[%s1257 + $0x14] sm:$0xf]
        %v1264 = vld [vmem:[%s1257 + $0x18] sm:$0xf]
        %v1265 = vld [vmem:[%s1257 + $0x1c] sm:$0xf]
        %v1269 = vunpack.c.l.b16 %v1254
        %v1270 = vunpack.c.l.b16 %v1255
        %v1271 = vunpack.c.l.b16 %v1256
        %v1272 = vpack.c.b16 %v1270, %v1269
        %v1273 = vpack.c.b16 %v1271, %v1271
        %v1282 = vunpack.c.l.b16 %v1258
        %v1283 = vunpack.c.l.b16 %v1259
        %v1284 = vunpack.c.l.b16 %v1260
        %v1285 = vunpack.c.l.b16 %v1261
        %v1286 = vunpack.c.l.b16 %v1262
        %v1287 = vunpack.c.l.b16 %v1263
        %v1288 = vunpack.c.l.b16 %v1264
        %v1289 = vunpack.c.l.b16 %v1265
        %v1290 = vpack.c.b16 %v1283, %v1282
        %v1291 = vpack.c.b16 %v1285, %v1284
        %v1292 = vpack.c.b16 %v1287, %v1286
        %v1293 = vpack.c.b16 %v1289, %v1288
        %v1299 = vsel %vm859, %v1272, 0
        %v1302 = vsel %vm859, %v1273, 0
        %1304 = vmatprep.subr.bf16.mxu0 0
        %1305 = vmatpush1.bf16.msra.mxu0 %v1290
        %1306 = vmatprep.subr.bf16.mxu0 0
        %1307 = vmatpush1.bf16.msra.mxu0 %v1291
        %1308 = vmatprep.subr.bf16.mxu0 0
        %1309 = vmatpush1.bf16.msra.mxu0 %v1292
        %1310 = vmatprep.subr.bf16.mxu0 0
        %1311 = vmatpush1.bf16.msra.mxu0 %v1293
        %1312 = vmatprep.subr.bf16.mxu0 0
        %1313 = vmatpush1.bf16.msra.mxu0 0
        %1314 = vmatprep.subr.bf16.mxu0 0
        %1315 = vmatpush1.bf16.msra.mxu0 0
        %1316 = vmatprep.subr.bf16.mxu0 0
        %1317 = vmatpush1.bf16.msra.mxu0 0
        %1318 = vmatprep.subr.bf16.mxu0 0
        %1319 = vmatpush1.bf16.msra.mxu0 0
        %1320 = vmatprep.subr.bf16.mxu0 0
        %1321 = vmatpush1.bf16.msra.mxu0 0
        %1322 = vmatprep.subr.bf16.mxu0 0
        %1323 = vmatpush1.bf16.msra.mxu0 0
        %1324 = vmatprep.subr.bf16.mxu0 0
        %1325 = vmatpush1.bf16.msra.mxu0 0
        %1326 = vmatprep.subr.bf16.mxu0 0
        %1327 = vmatpush1.bf16.msra.mxu0 0
        %1328 = vmatprep.subr.bf16.mxu0 0
        %1329 = vmatpush1.bf16.msra.mxu0 0
        %1330 = vmatprep.subr.bf16.mxu0 0
        %1331 = vmatpush1.bf16.msra.mxu0 0
        %1332 = vmatprep.subr.bf16.mxu0 0
        %1333 = vmatpush1.bf16.msra.mxu0 0
        %1334 = vmatprep.subr.bf16.mxu0 0
        %1335 = vmatpush1.bf16.msra.mxu0 0
        %1336 = vmatprep.mubr.bf16.mxu0 0
        %1337 = vmatmul.mubr.bf16.gmra.mrb[0].mxu0 %v1299
        %v1338 = vpop.f32.mrb[0].mxu0
        %v1339 = vadd.f32 0.0, %v1338
        %v1340 = vpop.f32.mrb[0].mxu0
        %v1341 = vpop.f32.mrb[0].mxu0
        %v1342 = vadd.f32 0.0, %v1341
        %v1343 = vpop.f32.mrb[0].mxu0
        %1344 = vmatprep.mubr.bf16.mxu0 0
        %1345 = vmatmul.mubr.bf16.gmra.mrb[0].mxu0 %v1302
        %v1346 = vpop.f32.mrb[0].mxu0
        %v1347 = vadd.f32 0.0, %v1346
        %v1348 = vpop.f32.mrb[0].mxu0
        %v1349 = vpop.f32.mrb[0].mxu0
        %v1350 = vpop.f32.mrb[0].mxu0
        %1351 = vdwg.mxu0
        %v1352 = vld [vmem:[#allocation3] sm:$0xff]
        %v1353 = vld [vmem:[#allocation3 + $0x8] sm:$0xff]
        %v1354 = vld [vmem:[#allocation3 + $0x10] sm:$0xf]
        %v1355 = vadd.f32 %v1352, %v1339
        %v1356 = vadd.f32 %v1353, %v1342
        %v1357 = vadd.f32 %v1354, %v1347
        %1358 = vst [vmem:[#allocation3] sm:$0xff] %v1355
        %1359 = vst [vmem:[#allocation3 + $0x8] sm:$0xff] %v1356
        %1360 = vst [vmem:[#allocation3 + $0x10] sm:$0xf] %v1357
        %v1361 = vld [vmem:[%s693] sm:$0xf]
        %v1362 = vld [vmem:[%s693 + $0x4] sm:$0xf]
        %v1363 = vld [vmem:[%s693 + $0x8] sm:$0x7]
        %s1364 = scalar_lea.vmem [#allocation9], 160
        %v1365 = vld [vmem:[%s1364] sm:$0xf]
        %v1366 = vld [vmem:[%s1364 + $0x4] sm:$0xf]
        %v1367 = vld [vmem:[%s1364 + $0x8] sm:$0xf]
        %v1368 = vld [vmem:[%s1364 + $0xc] sm:$0xf]
        %v1369 = vld [vmem:[%s1364 + $0x10] sm:$0xf]
        %v1370 = vld [vmem:[%s1364 + $0x14] sm:$0xf]
        %v1371 = vld [vmem:[%s1364 + $0x18] sm:$0xf]
        %v1372 = vld [vmem:[%s1364 + $0x1c] sm:$0xf]
        %v1376 = vunpack.c.l.b16 %v1361
        %v1377 = vunpack.c.l.b16 %v1362
        %v1378 = vunpack.c.l.b16 %v1363
        %v1379 = vpack.c.b16 %v1377, %v1376
        %v1380 = vpack.c.b16 %v1378, %v1378
        %v1382 = vshrl.u32 %v1379, 16
        %v1384 = vshll.u32 %v1379, 16
        %v1386 = vrot.slane %v1384, 1
        %v1387 = vor.u32 %v1382, %v1386
        %v1389 = vshll.u32 %v1380, 16
        %v1391 = vrot.slane %v1389, 1
        %v1392 = vsel %vm1044, %v1387, %v1391
        %v1393 = vshrl.u32 %v1380, 16
        %v1395 = vor.u32 %v1393, %v1391
        %v1404 = vunpack.c.l.b16 %v1365
        %v1405 = vunpack.c.l.b16 %v1366
        %v1406 = vunpack.c.l.b16 %v1367
        %v1407 = vunpack.c.l.b16 %v1368
        %v1408 = vunpack.c.l.b16 %v1369
        %v1409 = vunpack.c.l.b16 %v1370
        %v1410 = vunpack.c.l.b16 %v1371
        %v1411 = vunpack.c.l.b16 %v1372
        %v1412 = vpack.c.b16 %v1405, %v1404
        %v1413 = vpack.c.b16 %v1407, %v1406
        %v1414 = vpack.c.b16 %v1409, %v1408
        %v1415 = vpack.c.b16 %v1411, %v1410
        %v1421 = vsel %vm859, %v1392, 0
        %v1424 = vsel %vm859, %v1395, 0
        %1426 = vmatprep.subr.bf16.mxu0 0
        %1427 = vmatpush1.bf16.msra.mxu0 %v1412
        %1428 = vmatprep.subr.bf16.mxu0 0
        %1429 = vmatpush1.bf16.msra.mxu0 %v1413
        %1430 = vmatprep.subr.bf16.mxu0 0
        %1431 = vmatpush1.bf16.msra.mxu0 %v1414
        %1432 = vmatprep.subr.bf16.mxu0 0
        %1433 = vmatpush1.bf16.msra.mxu0 %v1415
        %1434 = vmatprep.subr.bf16.mxu0 0
        %1435 = vmatpush1.bf16.msra.mxu0 0
        %1436 = vmatprep.subr.bf16.mxu0 0
        %1437 = vmatpush1.bf16.msra.mxu0 0
        %1438 = vmatprep.subr.bf16.mxu0 0
        %1439 = vmatpush1.bf16.msra.mxu0 0
        %1440 = vmatprep.subr.bf16.mxu0 0
        %1441 = vmatpush1.bf16.msra.mxu0 0
        %1442 = vmatprep.subr.bf16.mxu0 0
        %1443 = vmatpush1.bf16.msra.mxu0 0
        %1444 = vmatprep.subr.bf16.mxu0 0
        %1445 = vmatpush1.bf16.msra.mxu0 0
        %1446 = vmatprep.subr.bf16.mxu0 0
        %1447 = vmatpush1.bf16.msra.mxu0 0
        %1448 = vmatprep.subr.bf16.mxu0 0
        %1449 = vmatpush1.bf16.msra.mxu0 0
        %1450 = vmatprep.subr.bf16.mxu0 0
        %1451 = vmatpush1.bf16.msra.mxu0 0
        %1452 = vmatprep.subr.bf16.mxu0 0
        %1453 = vmatpush1.bf16.msra.mxu0 0
        %1454 = vmatprep.subr.bf16.mxu0 0
        %1455 = vmatpush1.bf16.msra.mxu0 0
        %1456 = vmatprep.subr.bf16.mxu0 0
        %1457 = vmatpush1.bf16.msra.mxu0 0
        %1458 = vmatprep.mubr.bf16.mxu0 0
        %1459 = vmatmul.mubr.bf16.gmra.mrb[0].mxu0 %v1421
        %v1460 = vpop.f32.mrb[0].mxu0
        %v1461 = vadd.f32 0.0, %v1460
        %v1462 = vpop.f32.mrb[0].mxu0
        %v1463 = vpop.f32.mrb[0].mxu0
        %v1464 = vadd.f32 0.0, %v1463
        %v1465 = vpop.f32.mrb[0].mxu0
        %1466 = vmatprep.mubr.bf16.mxu0 0
        %1467 = vmatmul.mubr.bf16.gmra.mrb[0].mxu0 %v1424
        %v1468 = vpop.f32.mrb[0].mxu0
        %v1469 = vadd.f32 0.0, %v1468
        %v1470 = vpop.f32.mrb[0].mxu0
        %v1471 = vpop.f32.mrb[0].mxu0
        %v1472 = vpop.f32.mrb[0].mxu0
        %1473 = vdwg.mxu0
        %v1474 = vld [vmem:[#allocation3] sm:$0xff]
        %v1475 = vld [vmem:[#allocation3 + $0x8] sm:$0xff]
        %v1476 = vld [vmem:[#allocation3 + $0x10] sm:$0xf]
        %v1477 = vadd.f32 %v1474, %v1461
        %v1478 = vadd.f32 %v1475, %v1464
        %v1479 = vadd.f32 %v1476, %v1469
        %1480 = vst [vmem:[#allocation3] sm:$0xff] %v1477
        %1481 = vst [vmem:[#allocation3 + $0x8] sm:$0xff] %v1478
        %1482 = vst [vmem:[#allocation3 + $0x10] sm:$0xf] %v1479
        %v1483 = vld [vmem:[#allocation2] sm:$0xc]
        %v1484 = vld [vmem:[#allocation2 + $0x4] sm:$0xf]
        %v1485 = vld [vmem:[#allocation2 + $0x8] sm:$0xf]
        %v1486 = vld [vmem:[#allocation2 + $0xc] sm:$0x1]
        %s1487 = scalar_lea.vmem [#allocation9], 192
        %v1488 = vld [vmem:[%s1487] sm:$0xf]
        %v1489 = vld [vmem:[%s1487 + $0x4] sm:$0xf]
        %v1490 = vld [vmem:[%s1487 + $0x8] sm:$0xf]
        %v1491 = vld [vmem:[%s1487 + $0xc] sm:$0xf]
        %v1492 = vld [vmem:[%s1487 + $0x10] sm:$0xf]
        %v1493 = vld [vmem:[%s1487 + $0x14] sm:$0xf]
        %v1494 = vld [vmem:[%s1487 + $0x18] sm:$0xf]
        %v1495 = vld [vmem:[%s1487 + $0x1c] sm:$0xf]
        %v1500 = vunpack.c.l.b16 %v1483
        %v1501 = vunpack.c.l.b16 %v1484
        %v1502 = vunpack.c.l.b16 %v1485
        %v1503 = vunpack.c.l.b16 %v1486
        %v1504 = vpack.c.b16 %v1501, %v1500
        %v1505 = vpack.c.b16 %v1503, %v1502
        %vm1506 = vsmask.f32 5376
        %v1508 = vshrl.u32 %v1504, 16
        %v1510 = vrot.slane %v1508, 2
        %v1511 = vshll.u32 %v1504, 16
        %v1513 = vrot.slane %v1511, 3
        %v1514 = vor.u32 %v1510, %v1513
        %v1516 = vshrl.u32 %v1505, 16
        %v1518 = vrot.slane %v1516, 2
        %v1519 = vshll.u32 %v1505, 16
        %v1521 = vrot.slane %v1519, 3
        %v1522 = vor.u32 %v1518, %v1521
        %v1523 = vsel %vm1506, %v1514, %v1522
        %v1532 = vunpack.c.l.b16 %v1488
        %v1533 = vunpack.c.l.b16 %v1489
        %v1534 = vunpack.c.l.b16 %v1490
        %v1535 = vunpack.c.l.b16 %v1491
        %v1536 = vunpack.c.l.b16 %v1492
        %v1537 = vunpack.c.l.b16 %v1493
        %v1538 = vunpack.c.l.b16 %v1494
        %v1539 = vunpack.c.l.b16 %v1495
        %v1540 = vpack.c.b16 %v1533, %v1532
        %v1541 = vpack.c.b16 %v1535, %v1534
        %v1542 = vpack.c.b16 %v1537, %v1536
        %v1543 = vpack.c.b16 %v1539, %v1538
        %v1549 = vsel %vm859, %v1523, 0
        %v1552 = vsel %vm859, %v1522, 0
        %1554 = vmatprep.subr.bf16.mxu0 0
        %1555 = vmatpush1.bf16.msra.mxu0 %v1540
        %1556 = vmatprep.subr.bf16.mxu0 0
        %1557 = vmatpush1.bf16.msra.mxu0 %v1541
        %1558 = vmatprep.subr.bf16.mxu0 0
        %1559 = vmatpush1.bf16.msra.mxu0 %v1542
        %1560 = vmatprep.subr.bf16.mxu0 0
        %1561 = vmatpush1.bf16.msra.mxu0 %v1543
        %1562 = vmatprep.subr.bf16.mxu0 0
        %1563 = vmatpush1.bf16.msra.mxu0 0
        %1564 = vmatprep.subr.bf16.mxu0 0
        %1565 = vmatpush1.bf16.msra.mxu0 0
        %1566 = vmatprep.subr.bf16.mxu0 0
        %1567 = vmatpush1.bf16.msra.mxu0 0
        %1568 = vmatprep.subr.bf16.mxu0 0
        %1569 = vmatpush1.bf16.msra.mxu0 0
        %1570 = vmatprep.subr.bf16.mxu0 0
        %1571 = vmatpush1.bf16.msra.mxu0 0
        %1572 = vmatprep.subr.bf16.mxu0 0
        %1573 = vmatpush1.bf16.msra.mxu0 0
        %1574 = vmatprep.subr.bf16.mxu0 0
        %1575 = vmatpush1.bf16.msra.mxu0 0
        %1576 = vmatprep.subr.bf16.mxu0 0
        %1577 = vmatpush1.bf16.msra.mxu0 0
        %1578 = vmatprep.subr.bf16.mxu0 0
        %1579 = vmatpush1.bf16.msra.mxu0 0
        %1580 = vmatprep.subr.bf16.mxu0 0
        %1581 = vmatpush1.bf16.msra.mxu0 0
        %1582 = vmatprep.subr.bf16.mxu0 0
        %1583 = vmatpush1.bf16.msra.mxu0 0
        %1584 = vmatprep.subr.bf16.mxu0 0
        %1585 = vmatpush1.bf16.msra.mxu0 0
        %1586 = vmatprep.mubr.bf16.mxu0 0
        %1587 = vmatmul.mubr.bf16.gmra.mrb[0].mxu0 %v1549
        %v1588 = vpop.f32.mrb[0].mxu0
        %v1589 = vadd.f32 0.0, %v1588
        %v1590 = vpop.f32.mrb[0].mxu0
        %v1591 = vpop.f32.mrb[0].mxu0
        %v1592 = vadd.f32 0.0, %v1591
        %v1593 = vpop.f32.mrb[0].mxu0
        %1594 = vmatprep.mubr.bf16.mxu0 0
        %1595 = vmatmul.mubr.bf16.gmra.mrb[0].mxu0 %v1552
        %v1596 = vpop.f32.mrb[0].mxu0
        %v1597 = vadd.f32 0.0, %v1596
        %v1598 = vpop.f32.mrb[0].mxu0
        %v1599 = vpop.f32.mrb[0].mxu0
        %v1600 = vpop.f32.mrb[0].mxu0
        %1601 = vdwg.mxu0
        %v1602 = vld [vmem:[#allocation3] sm:$0xff]
        %v1603 = vld [vmem:[#allocation3 + $0x8] sm:$0xff]
        %v1604 = vld [vmem:[#allocation3 + $0x10] sm:$0xf]
        %v1605 = vadd.f32 %v1602, %v1589
        %v1606 = vadd.f32 %v1603, %v1592
        %v1607 = vadd.f32 %v1604, %v1597
        %1608 = vst [vmem:[#allocation3] sm:$0xff] %v1605
        %1609 = vst [vmem:[#allocation3 + $0x8] sm:$0xff] %v1606
        %1610 = vst [vmem:[#allocation3 + $0x10] sm:$0xf] %v1607
        %v1611 = vld [vmem:[%s575] sm:$0xc]
        %v1612 = vld [vmem:[%s575 + $0x4] sm:$0xf]
        %v1613 = vld [vmem:[%s575 + $0x8] sm:$0xf]
        %v1614 = vld [vmem:[%s575 + $0xc] sm:$0x1]
        %s1615 = scalar_lea.vmem [#allocation9], 224
        %v1616 = vld [vmem:[%s1615] sm:$0xf]
        %v1617 = vld [vmem:[%s1615 + $0x4] sm:$0xf]
        %v1618 = vld [vmem:[%s1615 + $0x8] sm:$0xf]
        %v1619 = vld [vmem:[%s1615 + $0xc] sm:$0xf]
        %v1620 = vld [vmem:[%s1615 + $0x10] sm:$0xf]
        %v1621 = vld [vmem:[%s1615 + $0x14] sm:$0xf]
        %v1622 = vld [vmem:[%s1615 + $0x18] sm:$0xf]
        %v1623 = vld [vmem:[%s1615 + $0x1c] sm:$0xf]
        %v1628 = vunpack.c.l.b16 %v1611
        %v1629 = vunpack.c.l.b16 %v1612
        %v1630 = vunpack.c.l.b16 %v1613
        %v1631 = vunpack.c.l.b16 %v1614
        %v1632 = vpack.c.b16 %v1629, %v1628
        %v1633 = vpack.c.b16 %v1631, %v1630
        %v1635 = vshrl.u32 %v1632, 16
        %v1637 = vrot.slane %v1635, 2
        %v1638 = vshll.u32 %v1632, 16
        %v1640 = vrot.slane %v1638, 3
        %v1641 = vor.u32 %v1637, %v1640
        %v1643 = vshrl.u32 %v1633, 16
        %v1645 = vrot.slane %v1643, 2
        %v1646 = vshll.u32 %v1633, 16
        %v1648 = vrot.slane %v1646, 3
        %v1649 = vor.u32 %v1645, %v1648
        %v1650 = vsel %vm1506, %v1641, %v1649
        %v1659 = vunpack.c.l.b16 %v1616
        %v1660 = vunpack.c.l.b16 %v1617
        %v1661 = vunpack.c.l.b16 %v1618
        %v1662 = vunpack.c.l.b16 %v1619
        %v1663 = vunpack.c.l.b16 %v1620
        %v1664 = vunpack.c.l.b16 %v1621
        %v1665 = vunpack.c.l.b16 %v1622
        %v1666 = vunpack.c.l.b16 %v1623
        %v1667 = vpack.c.b16 %v1660, %v1659
        %v1668 = vpack.c.b16 %v1662, %v1661
        %v1669 = vpack.c.b16 %v1664, %v1663
        %v1670 = vpack.c.b16 %v1666, %v1665
        %v1676 = vsel %vm859, %v1650, 0
        %v1679 = vsel %vm859, %v1649, 0
        %1681 = vmatprep.subr.bf16.mxu0 0
        %1682 = vmatpush1.bf16.msra.mxu0 %v1667
        %1683 = vmatprep.subr.bf16.mxu0 0
        %1684 = vmatpush1.bf16.msra.mxu0 %v1668
        %1685 = vmatprep.subr.bf16.mxu0 0
        %1686 = vmatpush1.bf16.msra.mxu0 %v1669
        %1687 = vmatprep.subr.bf16.mxu0 0
        %1688 = vmatpush1.bf16.msra.mxu0 %v1670
        %1689 = vmatprep.subr.bf16.mxu0 0
        %1690 = vmatpush1.bf16.msra.mxu0 0
        %1691 = vmatprep.subr.bf16.mxu0 0
        %1692 = vmatpush1.bf16.msra.mxu0 0
        %1693 = vmatprep.subr.bf16.mxu0 0
        %1694 = vmatpush1.bf16.msra.mxu0 0
        %1695 = vmatprep.subr.bf16.mxu0 0
        %1696 = vmatpush1.bf16.msra.mxu0 0
        %1697 = vmatprep.subr.bf16.mxu0 0
        %1698 = vmatpush1.bf16.msra.mxu0 0
        %1699 = vmatprep.subr.bf16.mxu0 0
        %1700 = vmatpush1.bf16.msra.mxu0 0
        %1701 = vmatprep.subr.bf16.mxu0 0
        %1702 = vmatpush1.bf16.msra.mxu0 0
        %1703 = vmatprep.subr.bf16.mxu0 0
        %1704 = vmatpush1.bf16.msra.mxu0 0
        %1705 = vmatprep.subr.bf16.mxu0 0
        %1706 = vmatpush1.bf16.msra.mxu0 0
        %1707 = vmatprep.subr.bf16.mxu0 0
        %1708 = vmatpush1.bf16.msra.mxu0 0
        %1709 = vmatprep.subr.bf16.mxu0 0
        %1710 = vmatpush1.bf16.msra.mxu0 0
        %1711 = vmatprep.subr.bf16.mxu0 0
        %1712 = vmatpush1.bf16.msra.mxu0 0
        %1713 = vmatprep.mubr.bf16.mxu0 0
        %1714 = vmatmul.mubr.bf16.gmra.mrb[0].mxu0 %v1676
        %v1715 = vpop.f32.mrb[0].mxu0
        %v1716 = vadd.f32 0.0, %v1715
        %v1717 = vpop.f32.mrb[0].mxu0
        %v1718 = vpop.f32.mrb[0].mxu0
        %v1719 = vadd.f32 0.0, %v1718
        %v1720 = vpop.f32.mrb[0].mxu0
        %1721 = vmatprep.mubr.bf16.mxu0 0
        %1722 = vmatmul.mubr.bf16.gmra.mrb[0].mxu0 %v1679
        %v1723 = vpop.f32.mrb[0].mxu0
        %v1724 = vadd.f32 0.0, %v1723
        %v1725 = vpop.f32.mrb[0].mxu0
        %v1726 = vpop.f32.mrb[0].mxu0
        %v1727 = vpop.f32.mrb[0].mxu0
        %1728 = vdwg.mxu0
        %v1729 = vld [vmem:[#allocation3] sm:$0xff]
        %v1730 = vld [vmem:[#allocation3 + $0x8] sm:$0xff]
        %v1731 = vld [vmem:[#allocation3 + $0x10] sm:$0xf]
        %v1732 = vadd.f32 %v1729, %v1716
        %v1733 = vadd.f32 %v1730, %v1719
        %v1734 = vadd.f32 %v1731, %v1724
        %1735 = vst [vmem:[#allocation3] sm:$0xff] %v1732
        %1736 = vst [vmem:[#allocation3 + $0x8] sm:$0xff] %v1733
        %1737 = vst [vmem:[#allocation3 + $0x10] sm:$0xf] %v1734
        %v1738 = vld [vmem:[#allocation2] sm:$0x8]
        %v1739 = vld [vmem:[#allocation2 + $0x4] sm:$0xf]
        %v1740 = vld [vmem:[#allocation2 + $0x8] sm:$0xf]
        %v1741 = vld [vmem:[#allocation2 + $0xc] sm:$0x1]
        %s1742 = scalar_lea.vmem [#allocation9], 256
        %v1743 = vld [vmem:[%s1742] sm:$0xf]
        %v1744 = vld [vmem:[%s1742 + $0x4] sm:$0xf]
        %v1745 = vld [vmem:[%s1742 + $0x8] sm:$0xf]
        %v1746 = vld [vmem:[%s1742 + $0xc] sm:$0xf]
        %v1747 = vld [vmem:[%s1742 + $0x10] sm:$0xf]
        %v1748 = vld [vmem:[%s1742 + $0x14] sm:$0xf]
        %v1749 = vld [vmem:[%s1742 + $0x18] sm:$0xf]
        %v1750 = vld [vmem:[%s1742 + $0x1c] sm:$0xf]
        %v1755 = vunpack.c.l.b16 %v1738
        %v1756 = vunpack.c.l.b16 %v1739
        %v1757 = vunpack.c.l.b16 %v1740
        %v1758 = vunpack.c.l.b16 %v1741
        %v1759 = vpack.c.b16 %v1756, %v1755
        %v1760 = vpack.c.b16 %v1758, %v1757
        %vm1761 = vcmask 1044480
        %v1762 = vrot.slane %v1759, 3
        %v1763 = vrot.slane %v1760, 3
        %v1764 = vsel %vm1761, %v1762, %v1763
        %v1773 = vunpack.c.l.b16 %v1743
        %v1774 = vunpack.c.l.b16 %v1744
        %v1775 = vunpack.c.l.b16 %v1745
        %v1776 = vunpack.c.l.b16 %v1746
        %v1777 = vunpack.c.l.b16 %v1747
        %v1778 = vunpack.c.l.b16 %v1748
        %v1779 = vunpack.c.l.b16 %v1749
        %v1780 = vunpack.c.l.b16 %v1750
        %v1781 = vpack.c.b16 %v1774, %v1773
        %v1782 = vpack.c.b16 %v1776, %v1775
        %v1783 = vpack.c.b16 %v1778, %v1777
        %v1784 = vpack.c.b16 %v1780, %v1779
        %v1790 = vsel %vm859, %v1764, 0
        %v1793 = vsel %vm859, %v1763, 0
        %1795 = vmatprep.subr.bf16.mxu0 0
        %1796 = vmatpush1.bf16.msra.mxu0 %v1781
        %1797 = vmatprep.subr.bf16.mxu0 0
        %1798 = vmatpush1.bf16.msra.mxu0 %v1782
        %1799 = vmatprep.subr.bf16.mxu0 0
        %1800 = vmatpush1.bf16.msra.mxu0 %v1783
        %1801 = vmatprep.subr.bf16.mxu0 0
        %1802 = vmatpush1.bf16.msra.mxu0 %v1784
        %1803 = vmatprep.subr.bf16.mxu0 0
        %1804 = vmatpush1.bf16.msra.mxu0 0
        %1805 = vmatprep.subr.bf16.mxu0 0
        %1806 = vmatpush1.bf16.msra.mxu0 0
        %1807 = vmatprep.subr.bf16.mxu0 0
        %1808 = vmatpush1.bf16.msra.mxu0 0
        %1809 = vmatprep.subr.bf16.mxu0 0
        %1810 = vmatpush1.bf16.msra.mxu0 0
        %1811 = vmatprep.subr.bf16.mxu0 0
        %1812 = vmatpush1.bf16.msra.mxu0 0
        %1813 = vmatprep.subr.bf16.mxu0 0
        %1814 = vmatpush1.bf16.msra.mxu0 0
        %1815 = vmatprep.subr.bf16.mxu0 0
        %1816 = vmatpush1.bf16.msra.mxu0 0
        %1817 = vmatprep.subr.bf16.mxu0 0
        %1818 = vmatpush1.bf16.msra.mxu0 0
        %1819 = vmatprep.subr.bf16.mxu0 0
        %1820 = vmatpush1.bf16.msra.mxu0 0
        %1821 = vmatprep.subr.bf16.mxu0 0
        %1822 = vmatpush1.bf16.msra.mxu0 0
        %1823 = vmatprep.subr.bf16.mxu0 0
        %1824 = vmatpush1.bf16.msra.mxu0 0
        %1825 = vmatprep.subr.bf16.mxu0 0
        %1826 = vmatpush1.bf16.msra.mxu0 0
        %1827 = vmatprep.mubr.bf16.mxu0 0
        %1828 = vmatmul.mubr.bf16.gmra.mrb[0].mxu0 %v1790
        %v1829 = vpop.f32.mrb[0].mxu0
        %v1830 = vadd.f32 0.0, %v1829
        %v1831 = vpop.f32.mrb[0].mxu0
        %v1832 = vpop.f32.mrb[0].mxu0
        %v1833 = vadd.f32 0.0, %v1832
        %v1834 = vpop.f32.mrb[0].mxu0
        %1835 = vmatprep.mubr.bf16.mxu0 0
        %1836 = vmatmul.mubr.bf16.gmra.mrb[0].mxu0 %v1793
        %v1837 = vpop.f32.mrb[0].mxu0
        %v1838 = vadd.f32 0.0, %v1837
        %v1839 = vpop.f32.mrb[0].mxu0
        %v1840 = vpop.f32.mrb[0].mxu0
        %v1841 = vpop.f32.mrb[0].mxu0
        %1842 = vdwg.mxu0
        %v1843 = vld [vmem:[#allocation3] sm:$0xff]
        %v1844 = vld [vmem:[#allocation3 + $0x8] sm:$0xff]
        %v1845 = vld [vmem:[#allocation3 + $0x10] sm:$0xf]
        %v1846 = vadd.f32 %v1843, %v1830
        %v1847 = vadd.f32 %v1844, %v1833
        %v1848 = vadd.f32 %v1845, %v1838
        %1849 = vst [vmem:[#allocation3] sm:$0xff] %v1846
        %1850 = vst [vmem:[#allocation3 + $0x8] sm:$0xff] %v1847
        %1851 = vst [vmem:[#allocation3 + $0x10] sm:$0xf] %v1848
        %v1852 = vld [vmem:[#allocation3] sm:$0xff]
        %v1853 = vld [vmem:[#allocation3 + $0x8] sm:$0xff]
        %v1854 = vld [vmem:[#allocation3 + $0x10] sm:$0xf]
        %v1855 = vld [vmem:[#allocation10] sm:$0x1]
        %v1857 = vlaneseq
        %v1858 = vshrl.u32 %v1857, 7
        %v1859 = vsub.s32 0, %v1858
        %v1860 = vrot.slane %v1855, %v1859
        %v1862 = vadd.f32 %v1852, %v1860
        %v1863 = vadd.f32 %v1853, %v1860
        %v1864 = vadd.f32 %v1854, %v1860
        %v1865 = vlaneseq
        %v1866 = vshrl.u32 %v1865, 7
        %v1867 = vadd.s32 %v1866, 8
        %v1868 = vadd.s32 %v1866, 16
        %vm1869 = vcmp.lt.s32.totalorder %v1866, 0
        %v1870 = vsub.s32 0, %v1866
        %v1871 = vsel %vm1869, %v1870, %v1866
        %v1872 = vmul.u32.u64.compose %v1871, 3435973837
        %v1873 = vextract.low.u32 %v1872
        %v1874 = vextract.high.u32 %v1872
        %v1875 = vshrl.u32 %v1874, 2
        %v1876 = vmul.u32 %v1875, 5
        %v1877 = vsub.s32 %v1871, %v1876
        %v1878 = vsub.s32 0, %v1877
        %v1879 = vsel %vm1869, %v1878, %v1877
        %vm1880 = vcmp.lt.s32.totalorder %v1867, 0
        %v1881 = vsub.s32 0, %v1867
        %v1882 = vsel %vm1880, %v1881, %v1867
        %v1883 = vmul.u32.u64.compose %v1882, 3435973837
        %v1884 = vextract.low.u32 %v1883
        %v1885 = vextract.high.u32 %v1883
        %v1886 = vshrl.u32 %v1885, 2
        %v1887 = vmul.u32 %v1886, 5
        %v1888 = vsub.s32 %v1882, %v1887
        %v1889 = vsub.s32 0, %v1888
        %v1890 = vsel %vm1880, %v1889, %v1888
        %vm1891 = vcmp.lt.s32.totalorder %v1868, 0
        %v1892 = vsub.s32 0, %v1868
        %v1893 = vsel %vm1891, %v1892, %v1868
        %v1894 = vmul.u32.u64.compose %v1893, 3435973837
        %v1895 = vextract.low.u32 %v1894
        %v1896 = vextract.high.u32 %v1894
        %v1897 = vshrl.u32 %v1896, 2
        %v1898 = vmul.u32 %v1897, 5
        %v1899 = vsub.s32 %v1893, %v1898
        %v1900 = vsub.s32 0, %v1899
        %v1901 = vsel %vm1891, %v1900, %v1899
        %vm1902 = vcmp.ne.s32.totalorder %v1879, 0
        %vm1903 = vcmp.ne.s32.totalorder %v1890, 0
        %vm1904 = vcmp.ne.s32.totalorder %v1901, 0
        %vm1905 = vcmp.lt.s32.totalorder %v1879, 0
        %vm1906 = vcmp.lt.s32.totalorder %v1890, 0
        %vm1907 = vcmp.lt.s32.totalorder %v1901, 0
        %vm1908 = vmand %vm1905, %vm1902
        %vm1909 = vmand %vm1906, %vm1903
        %vm1910 = vmand %vm1907, %vm1904
        %v1911 = vadd.s32 %v1879, 5
        %v1912 = vadd.s32 %v1890, 5
        %v1913 = vadd.s32 %v1901, 5
        %v1914 = vsel %vm1908, %v1911, %v1879
        %v1915 = vsel %vm1909, %v1912, %v1890
        %v1916 = vsel %vm1910, %v1913, %v1901
        %vm1917 = vcmp.lt.s32.totalorder %v1914, 4
        %vm1918 = vcmp.lt.s32.totalorder %v1915, 4
        %vm1919 = vcmp.lt.s32.totalorder %v1916, 4
        %vm1920 = vcmp.gt.f32.partialorder %v1862, 0.0
        %vm1921 = vcmp.gt.f32.partialorder %v1863, 0.0
        %vm1922 = vcmp.gt.f32.partialorder %v1864, 0.0
        %v1923 = vsel %vm1917, 1, 0
        %v1924 = vsel %vm1918, 1, 0
        %v1925 = vsel %vm1919, 1, 0
        %vm1926 = vcmp.eq.s32.totalorder %v1923, 1
        %vm1927 = vcmp.eq.s32.totalorder %v1924, 1
        %vm1928 = vcmp.eq.s32.totalorder %v1925, 1
        %vm1929 = vmand %vm1926, %vm1920
        %vm1930 = vmand %vm1927, %vm1921
        %vm1931 = vmand %vm1928, %vm1922
        %v1932 = vsel %vm1929, %v1862, 0.0
        %v1933 = vsel %vm1930, %v1863, 0.0
        %v1934 = vsel %vm1931, %v1864, 0.0
        %v1935 = vadd.f32 %v1932, %v1933
        %vm1936 = vcmask 1043456
        %v1937 = vsel %vm1936, %v1934, 0.0
        %v1938 = vadd.f32 %v1935, %v1937
        %v1939 = vrot.slane %v1938, 4
        %v1940 = vadd.f32 %v1938, %v1939
        %v1941 = vrot.slane %v1940, 2
        %v1942 = vadd.f32 %v1940, %v1941
        %v1943 = vrot.slane %v1942, 1
        %v1944 = vadd.f32 %v1942, %v1943
        %v1945 = vmul.f32 %v1944, 0.0625
        %v1946 = vpack.c.bf16 %v1945, %v1945
        %v1947 = vld [vmem:[#allocation12] sm:$0xf]
        %v1948 = vld [vmem:[#allocation12 + $0x4] sm:$0xf]
        %v1949 = vld [vmem:[#allocation12 + $0x8] sm:$0xf]
        %v1950 = vld [vmem:[#allocation12 + $0xc] sm:$0xf]
        %v1951 = vld [vmem:[#allocation12 + $0x10] sm:$0xf]
        %v1952 = vld [vmem:[#allocation12 + $0x14] sm:$0xf]
        %v1953 = vld [vmem:[#allocation12 + $0x18] sm:$0xf]
        %v1954 = vld [vmem:[#allocation12 + $0x1c] sm:$0xf]
        %v1955 = vld [vmem:[#allocation12 + $0x20] sm:$0xf]
        %v1956 = vld [vmem:[#allocation12 + $0x24] sm:$0xf]
        %v1957 = vld [vmem:[#allocation12 + $0x28] sm:$0xf]
        %v1958 = vld [vmem:[#allocation12 + $0x2c] sm:$0xf]
        %v1959 = vld [vmem:[#allocation12 + $0x30] sm:$0xf]
        %v1960 = vld [vmem:[#allocation12 + $0x34] sm:$0xf]
        %v1961 = vld [vmem:[#allocation12 + $0x38] sm:$0xf]
        %v1962 = vld [vmem:[#allocation12 + $0x3c] sm:$0xf]
        %v1963 = vld [vmem:[#allocation13] sm:$0x1]
        %v1980 = vunpack.c.l.b16 %v1947
        %v1981 = vunpack.c.l.b16 %v1948
        %v1982 = vunpack.c.l.b16 %v1949
        %v1983 = vunpack.c.l.b16 %v1950
        %v1984 = vunpack.c.l.b16 %v1951
        %v1985 = vunpack.c.l.b16 %v1952
        %v1986 = vunpack.c.l.b16 %v1953
        %v1987 = vunpack.c.l.b16 %v1954
        %v1988 = vunpack.c.l.b16 %v1955
        %v1989 = vunpack.c.l.b16 %v1956
        %v1990 = vunpack.c.l.b16 %v1957
        %v1991 = vunpack.c.l.b16 %v1958
        %v1992 = vunpack.c.l.b16 %v1959
        %v1993 = vunpack.c.l.b16 %v1960
        %v1994 = vunpack.c.l.b16 %v1961
        %v1995 = vunpack.c.l.b16 %v1962
        %v1996 = vpack.c.b16 %v1981, %v1980
        %v1997 = vpack.c.b16 %v1983, %v1982
        %v1998 = vpack.c.b16 %v1985, %v1984
        %v1999 = vpack.c.b16 %v1987, %v1986
        %v2000 = vpack.c.b16 %v1989, %v1988
        %v2001 = vpack.c.b16 %v1991, %v1990
        %v2002 = vpack.c.b16 %v1993, %v1992
        %v2003 = vpack.c.b16 %v1995, %v1994
        %2012 = vmatprep.subr.bf16.mxu0 0
        %2013 = vmatpush1.bf16.msra.mxu0 %v1996
        %2014 = vmatprep.subr.bf16.mxu0 0
        %2015 = vmatpush1.bf16.msra.mxu0 %v1997
        %2016 = vmatprep.subr.bf16.mxu0 0
        %2017 = vmatpush1.bf16.msra.mxu0 %v1998
        %2018 = vmatprep.subr.bf16.mxu0 0
        %2019 = vmatpush1.bf16.msra.mxu0 %v1999
        %2020 = vmatprep.subr.bf16.mxu0 0
        %2021 = vmatpush1.bf16.msra.mxu0 %v2000
        %2022 = vmatprep.subr.bf16.mxu0 0
        %2023 = vmatpush1.bf16.msra.mxu0 %v2001
        %2024 = vmatprep.subr.bf16.mxu0 0
        %2025 = vmatpush1.bf16.msra.mxu0 %v2002
        %2026 = vmatprep.subr.bf16.mxu0 0
        %2027 = vmatpush1.bf16.msra.mxu0 %v2003
        %2028 = vmatprep.subr.bf16.mxu0 0
        %2029 = vmatpush1.bf16.msra.mxu0 0
        %2030 = vmatprep.subr.bf16.mxu0 0
        %2031 = vmatpush1.bf16.msra.mxu0 0
        %2032 = vmatprep.subr.bf16.mxu0 0
        %2033 = vmatpush1.bf16.msra.mxu0 0
        %2034 = vmatprep.subr.bf16.mxu0 0
        %2035 = vmatpush1.bf16.msra.mxu0 0
        %2036 = vmatprep.subr.bf16.mxu0 0
        %2037 = vmatpush1.bf16.msra.mxu0 0
        %2038 = vmatprep.subr.bf16.mxu0 0
        %2039 = vmatpush1.bf16.msra.mxu0 0
        %2040 = vmatprep.subr.bf16.mxu0 0
        %2041 = vmatpush1.bf16.msra.mxu0 0
        %2042 = vmatprep.subr.bf16.mxu0 0
        %2043 = vmatpush1.bf16.msra.mxu0 0
        %2044 = vmatprep.mubr.bf16.mxu0 0
        %2045 = vmatmul.mubr.bf16.gmra.mrb[0].mxu0 %v1946
        %v2046 = vpop.f32.mrb[0].mxu0
        %v2047 = vadd.f32 %v1963, %v2046
        %v2048 = vpop.f32.mrb[0].mxu0
        %v2049 = vpop.f32.mrb[0].mxu0
        %v2050 = vpop.f32.mrb[0].mxu0
        %2051 = vdwg.mxu0
        %2052 = vst [vmem:[%s337] sm:$0x1] %v2047
        %s2053 = sand.u32 %s165, 1
        %s2054 = scalar_lea.sflag [#allocation6], %s2053
        %s2055 = sand.u32 %s165, 1
        %s2056 = scalar_lea.vmem [#allocation15], %s2055
        // Predicated region
        $region69: #{distortion_classifier_forward.1} parent=43 // pred_check
          %p2057 = pneg %p175
        $region70: #{distortion_classifier_forward.1} parent=43 // pred_check_branch
          %2059 = sbr.rel (%p2057) target = $region72
        $region71: #{distortion_classifier_forward.1} parent=43 // pred_region
          %s2061 = ssub.s32 16, 16
          %2062 = vsyncadd %s2054, %s2061
          %s2063 = smul.addr %s26, 16
          %s2064 = scalar_lea.hbm %s6, %s2063
          %s2066 = sshll.u32 %s2056, 4
          %s2067 = int_to_ptr.vmem [resolvable:$true] %s2066
          %2069 = dma.vmem_to_hbm [thread:$0]  %s2067, 16, %s2064, %s2054
        $region72: #{distortion_classifier_forward.1} parent=43 // pred_fallthru
          _
      $region44: #{distortion_classifier_forward.1} parent=5 // pred_fallthru
        _
      %p2070 = scmp.le.s32.totalorder 2, %s21
      // Predicated region
      $region73: #{distortion_classifier_forward.1} parent=5 // pred_check
        %p2071 = pneg %p2070
      $region74: #{distortion_classifier_forward.1} parent=5 // pred_check_branch
        %2073 = sbr.rel (%p2071) target = $region76
      $region75: #{distortion_classifier_forward.1} parent=5 // pred_region
        %s2074 = ssub.s32 %s21, 2
        // Predicated region
        $region77: #{distortion_classifier_forward.1} parent=75 // pred_check
          %p2075 = pneg %p181
        $region78: #{distortion_classifier_forward.1} parent=75 // pred_check_branch
          %2077 = sbr.rel (%p2075) target = $region80
        $region79: #{distortion_classifier_forward.1} parent=75 // pred_region
          %s2078 = sand.u32 %s166, 1
          %s2079 = scalar_lea.sflag [#allocation6], %s2078
          %s2080 = sand.u32 %s166, 1
          %s2081 = scalar_lea.vmem [#allocation15], %s2080
          %2082 = dma.done %s2079, 16
        $region80: #{distortion_classifier_forward.1} parent=75 // pred_fallthru
          _
      $region76: #{distortion_classifier_forward.1} parent=5 // pred_fallthru
        _
    $region6: #{distortion_classifier_forward.1} parent=1 // loop_footer
      %s25 = sadd.s32 1, %s21
    $region7: #{distortion_classifier_forward.1} parent=1 // loop_footer_branch
      %20 = sbr.rel target = $region3
    $region8: #{distortion_classifier_forward.1} parent=1 // loop_exit
      _
    %2083 = vsyncpa [#allocation5], 1
    %s2084 = scalar_lea.sflag [#allocation5], 1
    %2085 = vsyncpa %s2084, 1
    %2086 = vsyncpa [#allocation8], 1
    %2087 = vsyncpa [#allocation11], 1
    %2088 = vsyncpa [#allocation14], 1
    %2089 = vsyncpa [#allocation6], 1
    %s2090 = scalar_lea.sflag [#allocation6], 1
    %2091 = vsyncpa %s2090, 1

</llo_original>
